<compile_context>
chip_gen: v5e
topology: v5e:2x2
jax: 0.10.0
libtpu: 0.0.40
codegen_flags: <defaults>
</compile_context>

<pallas_src>
import math
import numpy as np
import jax
import jax.numpy as jnp
from jax.experimental import pallas as pl
from jax.experimental.pallas import tpu as pltpu


# ----------------------------- Pallas kernels -----------------------------

def _softmax_rows(s):
    """Row softmax; divide replaced by EUP approx reciprocal."""
    s = s - jnp.max(s, axis=-1, keepdims=True)
    p = jnp.exp(s)
    return p * pl.reciprocal(jnp.sum(p, axis=-1, keepdims=True), approx=True)


def _encoder_kernel(p_ref, wp_ref, b_ref, ws_ref, o_ref):
    """Fused patch-embed + bias + ReLU(skip1|skip2): (R, CPP) -> (R, 3D)."""
    D = wp_ref.shape[1]
    patches = p_ref[...].astype(jnp.bfloat16)
    tok = jnp.dot(patches, wp_ref[...],
                  preferred_element_type=jnp.float32) + b_ref[...]
    skips = jax.nn.relu(
        jnp.dot(tok.astype(jnp.bfloat16), ws_ref[...],
                preferred_element_type=jnp.float32))
    o_ref[:, :D] = tok
    o_ref[:, D:] = skips


def _former_kernel(r_ref, skip_ref, pe_ref, ctx_ref, sp_ref,
                   wq_ref, wkv_ref, wo_ref, wmix_ref, out_ref, mix_ref):
    """Fused OnePrompt-former block for one batch element."""
    D = r_ref.shape[-1]
    scale = 1.0 / math.sqrt(D)
    r = r_ref[0]                                              # (N, D) f32
    rq = (r + pe_ref[...] + skip_ref[0]).astype(jnp.bfloat16)
    ctx = ctx_ref[0].astype(jnp.bfloat16)                     # (Nc, D)
    q = jnp.dot(rq, wq_ref[...], preferred_element_type=jnp.float32)
    kv = jnp.dot(ctx, wkv_ref[...], preferred_element_type=jnp.float32)
    k = kv[:, :D]
    v = kv[:, D:]
    # QK^T without an explicit transpose of K.
    s = jax.lax.dot_general(
        q.astype(jnp.bfloat16), k.astype(jnp.bfloat16),
        (((1,), (1,)), ((), ())), preferred_element_type=jnp.float32) * scale
    p = _softmax_rows(s)
    attn = jnp.dot(p.astype(jnp.bfloat16), v.astype(jnp.bfloat16),
                   preferred_element_type=jnp.float32)
    out_ref[0] = r + jnp.dot(attn.astype(jnp.bfloat16), wo_ref[...],
                             preferred_element_type=jnp.float32)
    sp = sp_ref[0]
    mix_ref[0] = sp + jnp.dot(sp.astype(jnp.bfloat16), wmix_ref[...],
                              preferred_element_type=jnp.float32)


def _decoder_kernel(src_ref, pe_ref, nme_ref, tok_ref, wdq_ref, wdk_ref,
                    wdv_ref, whyp_ref, wiou_ref, k8t_ref, k16t_ref,
                    low_ref, mask_ref, iou_ref):
    """Fused mask decoder + bilinear upsample + postprocess for one batch."""
    D = src_ref.shape[-1]
    scale = 1.0 / math.sqrt(D)
    src = src_ref[0] + nme_ref[...]                           # (N, D) f32
    srcb = src.astype(jnp.bfloat16)
    kin = (src + pe_ref[...]).astype(jnp.bfloat16)
    tok = tok_ref[0].astype(jnp.bfloat16)                     # (S, D)
    q = jnp.dot(tok, wdq_ref[...], preferred_element_type=jnp.float32)
    k = jnp.dot(kin, wdk_ref[...], preferred_element_type=jnp.float32)
    v = jnp.dot(srcb, wdv_ref[...], preferred_element_type=jnp.float32)
    s = jax.lax.dot_general(
        q.astype(jnp.bfloat16), k.astype(jnp.bfloat16),
        (((1,), (1,)), ((), ())), preferred_element_type=jnp.float32) * scale
    p = _softmax_rows(s)
    attn = jnp.dot(p.astype(jnp.bfloat16), v.astype(jnp.bfloat16),
                   preferred_element_type=jnp.float32)        # (S, D)
    mask_tok = attn[0:1, :].astype(jnp.bfloat16)              # (1, D)
    hyper = jnp.dot(mask_tok, whyp_ref[...],
                    preferred_element_type=jnp.float32)       # (1, D)
    iou_ref[0] = jnp.dot(mask_tok, wiou_ref[...],
                         preferred_element_type=jnp.float32)  # (1, 1)
    # Hyper-weighted channel reduction over the (src + dense) embedding, then
    # the separable bilinear 4x4 -> 8x8 -> 16x16 interpolation as lane-dense
    # kron-matrix matmuls (outputs flattened: 64 / 256 lanes).
    w_row = jax.lax.dot_general(hyper, src, (((1,), (1,)), ((), ())),
                                preferred_element_type=jnp.float32)   # (1, N)
    low_row = jnp.dot(w_row, k8t_ref[...],
                      preferred_element_type=jnp.float32)     # (1, 64)
    low_ref[0] = low_row
    mask_ref[0] = jnp.dot(low_row, k16t_ref[...],
                          preferred_element_type=jnp.float32)  # (1, 256)


# ----------------------------- glue helpers -----------------------------

def bilinear_matrix(out_size, in_size):
    """Row-interpolation matrix matching F.interpolate(mode='bilinear',
    align_corners=False) along one axis (numpy, host-time)."""
    o = np.arange(out_size, dtype=np.float64)
    src = (o + 0.5) * (in_size / out_size) - 0.5
    i0 = np.floor(src).astype(np.int64)
    frac = src - i0
    i0c = np.clip(i0, 0, in_size - 1)
    i1c = np.clip(i0 + 1, 0, in_size - 1)
    W = np.zeros((out_size, in_size), dtype=np.float64)
    rows = o.astype(np.int64)
    np.add.at(W, (rows, i0c), 1.0 - frac)
    np.add.at(W, (rows, i1c), frac)
    return W.astype(np.float32)


def patchify(x, P):
    """NCHW -> (B, num_patches, C*P*P) row-major patches (n = gy*G + gx)."""
    B, C, H, W = x.shape
    gh, gw = H // P, W // P
    x = x.reshape(B, C, gh, P, gw, P)
    x = x.transpose(0, 2, 4, 1, 3, 5)
    return x.reshape(B, gh * gw, C * P * P)


def generate_click_prompt2D(img, msk):
    # TODO(synk): the reference `generate_click_prompt2D` is not defined in the
    # provided source; deterministic stand-in: click at the per-batch argmax of
    # the template mask, label = 1.
    B = msk.shape[0]
    W = msk.shape[-1]
    flat = msk[:, 0].reshape(B, -1)
    idx = jnp.argmax(flat, axis=-1)
    ys = (idx // W).astype(jnp.float32)
    xs = (idx % W).astype(jnp.float32)
    pt = jnp.stack([xs, ys], axis=-1)                 # (B, 2)
    labels = jnp.ones((B,), dtype=jnp.int32)
    return pt, labels


# ----------------------------- OnePrompt model -----------------------------

class OnePrompt:
    mask_threshold: float = 0.0
    image_format: str = "RGB"

    def __init__(self, key, img_size=16, C=3, P=4, D=32,
                 pixel_mean=(123.675, 116.28, 103.53),
                 pixel_std=(58.395, 57.12, 57.375)):
        self.img_size = img_size
        self.C = C
        self.P = P
        self.D = D
        self.G = img_size // P                         # embedding grid (4x4)
        self.N = self.G * self.G                       # tokens per image
        self.low_res = 2 * self.G                      # low-res mask size (8x8)
        self.pixel_mean = jnp.asarray(pixel_mean, jnp.float32).reshape(-1, 1, 1)
        self.pixel_std = jnp.asarray(pixel_std, jnp.float32).reshape(-1, 1, 1)
        # Separable bilinear interpolation folded into kron matrices so the
        # decoder kernel can emit lane-dense flattened masks.
        Lup = bilinear_matrix(self.low_res, self.G)            # (8, 4)
        Lpost = bilinear_matrix(self.img_size, self.low_res)   # (16, 8)
        self.K8T = jnp.asarray(np.kron(Lup, Lup).T, jnp.float32)       # (16, 64)
        self.K16T = jnp.asarray(np.kron(Lpost, Lpost).T, jnp.float32)  # (64, 256)
        self.params = self._init_params(key)
        # Fixed positional encoding in token layout (N, D) -- model constant.
        G = self.G
        yx = (jnp.arange(G, dtype=jnp.float32) + 0.5) / G
        yy, xx = jnp.meshgrid(yx, yx, indexing="ij")
        coords = jnp.stack([xx, yy], axis=-1)                  # (G, G, 2)
        proj = (2.0 * coords - 1.0) @ (2.0 * np.pi * self.params["pe_gauss"])
        self.pe_tok = jnp.concatenate(
            [jnp.sin(proj), jnp.cos(proj)], axis=-1).reshape(self.N, D)
        # jit the whole forward; the point-prompt branch is static so no
        # device->host sync blocks tracing.
        self._fwd = jax.jit(self._forward_impl, static_argnames=("has_pt",))
        # NOTE: image_encoder params are frozen in the torch module
        # (requires_grad=False); inference-only here so it is a no-op.

    def _init_params(self, key):
        ks = jax.random.split(key, 20)
        s = 0.05
        D, C, P = self.D, self.C, self.P

        def n(k, shape):
            return s * jax.random.normal(k, shape, dtype=jnp.float32)

        def nb(k, shape):                      # bf16 MXU weights, f32 accum
            return n(k, shape).astype(jnp.bfloat16)

        w_skips = jnp.concatenate([n(ks[1], (D, D)), n(ks[2], (D, D))], axis=1)
        wkv = jnp.concatenate([n(ks[10], (D, D)), n(ks[11], (D, D))], axis=1)
        return {
            # frozen image encoder (patch embed + two "skip" projections)
            "w_patch": nb(ks[0], (C * P * P, D)),
            "b_patch": jnp.zeros((1, D), jnp.float32),
            "w_skips": w_skips.astype(jnp.bfloat16),          # (D, 2D)
            # prompt encoder (small, stays f32 / pure JAX under jit)
            "pe_gauss": jax.random.normal(ks[3], (2, D // 2), dtype=jnp.float32),
            "label_emb": n(ks[4], (2, D)),
            "pad_token": n(ks[5], (D,)),
            "no_mask_embed": n(ks[6], (D,)),
            "p1_tok": n(ks[7], (D,)),
            "p2_tok": n(ks[8], (D,)),
            # oneprompt former
            "wq": nb(ks[9], (D, D)),
            "wkv": wkv.astype(jnp.bfloat16),                  # (D, 2D)
            "wo": nb(ks[12], (D, D)),
            "w_mix": nb(ks[13], (D, D)),
            # mask decoder
            "wdq": nb(ks[14], (D, D)),
            "wdk": nb(ks[15], (D, D)),
            "wdv": nb(ks[16], (D, D)),
            "w_hyper": nb(ks[17], (D, D)),
            "w_iou": nb(ks[18], (D, 1)),
        }

    # -------- synthetic sub-modules (hot paths fused into Pallas) --------

    def image_encoder(self, imgs):
        """Fused patch-embed + bias + ReLU skip projections (one Pallas call).
        Returns tokens (Bt, N, D) and [skip1, skip2] in the same layout."""
        Bt = imgs.shape[0]
        D, N = self.D, self.N
        patches = patchify(imgs, self.P).reshape(Bt * N, -1)
        R, CPP = patches.shape
        fused = pl.pallas_call(
            _encoder_kernel,
            out_shape=jax.ShapeDtypeStruct((R, 3 * D), jnp.float32),
            grid=(1,),
            in_specs=[pl.BlockSpec((R, CPP), lambda i: (0, 0)),
                      pl.BlockSpec((CPP, D), lambda i: (0, 0)),
                      pl.BlockSpec((1, D), lambda i: (0, 0)),
                      pl.BlockSpec((D, 2 * D), lambda i: (0, 0))],
            out_specs=pl.BlockSpec((R, 3 * D), lambda i: (0, 0)),
        )(patches, self.params["w_patch"], self.params["b_patch"],
          self.params["w_skips"])
        fused = fused.reshape(Bt, N, 3 * D)
        return fused[..., :D], [fused[..., D:2 * D], fused[..., 2 * D:]]

    def prompt_encoder(self, points, boxes=None, masks=None):
        coords, labels = points                                # (B,1,2), (B,1)
        B = coords.shape[0]
        D = self.D
        cn = coords.astype(jnp.float32) / self.img_size
        proj = (2.0 * cn - 1.0) @ (2.0 * np.pi * self.params["pe_gauss"])
        pt_emb = jnp.concatenate([jnp.sin(proj), jnp.cos(proj)], axis=-1)
        lab_emb = self.params["label_emb"][jnp.clip(labels, 0, 1)]
        pt_emb = pt_emb + lab_emb                               # (B,1,D)
        pad = jnp.broadcast_to(self.params["pad_token"][None, None, :], (B, 1, D))
        sparse = jnp.concatenate([pt_emb, pad], axis=1)         # (B,2,D)
        # dense prompt = no_mask_embed broadcast over spatial; token layout (1,D)
        dense = self.params["no_mask_embed"].reshape(1, D)
        p1 = jnp.broadcast_to(self.params["p1_tok"][None, None, :], (B, 1, D))
        p2 = jnp.broadcast_to(self.params["p2_tok"][None, None, :], (B, 1, D))
        return p1, p2, sparse, dense

    def get_dense_pe(self):
        G, D = self.G, self.D
        return self.pe_tok.reshape(G, G, D).transpose(2, 0, 1)[None]  # (1,D,G,G)

    def oneprompt_former(self, skips_raw, skips_tmp, raw_tok, tmp_tok, pt1, pt2,
                         image_pe_tok, sparse_prompt_embeddings,
                         dense_prompt_embeddings, multimask_output=False):
        B, N, D = raw_tok.shape
        ctx = jnp.concatenate([tmp_tok, skips_tmp[0], skips_tmp[1], pt1, pt2,
                               sparse_prompt_embeddings], axis=1)  # (B,Nc,D)
        Nc = ctx.shape[1]
        S = sparse_prompt_embeddings.shape[1]
        r_out, mixed = pl.pallas_call(
            _former_kernel,
            out_shape=(jax.ShapeDtypeStruct((B, N, D), jnp.float32),
                       jax.ShapeDtypeStruct((B, S, D), jnp.float32)),
            grid=(B,),
            in_specs=[
                pl.BlockSpec((1, N, D), lambda b: (b, 0, 0)),   # raw tokens
                pl.BlockSpec((1, N, D), lambda b: (b, 0, 0)),   # skip_raw1
                pl.BlockSpec((N, D), lambda b: (0, 0)),         # shared pos-enc
                pl.BlockSpec((1, Nc, D), lambda b: (b, 0, 0)),  # context tokens
                pl.BlockSpec((1, S, D), lambda b: (b, 0, 0)),   # sparse prompts
                pl.BlockSpec((D, D), lambda b: (0, 0)),         # wq
                pl.BlockSpec((D, 2 * D), lambda b: (0, 0)),     # wkv
                pl.BlockSpec((D, D), lambda b: (0, 0)),         # wo
                pl.BlockSpec((D, D), lambda b: (0, 0)),         # w_mix
            ],
            out_specs=(pl.BlockSpec((1, N, D), lambda b: (b, 0, 0)),
                       pl.BlockSpec((1, S, D), lambda b: (b, 0, 0))),
            compiler_params=pltpu.CompilerParams(
                dimension_semantics=("parallel",)),
        )(raw_tok, skips_raw[0], image_pe_tok, ctx, sparse_prompt_embeddings,
          self.params["wq"], self.params["wkv"], self.params["wo"],
          self.params["w_mix"])
        return r_out, mixed

    def mask_decoder(self, image_embeddings, image_pe_tok,
                     sparse_prompt_embeddings, dense_prompt_embeddings,
                     multimask_output=False):
        B, N, D = image_embeddings.shape
        S = sparse_prompt_embeddings.shape[1]
        L8 = self.low_res * self.low_res
        L16 = self.img_size * self.img_size
        low_flat, mask_flat, iou = pl.pallas_call(
            _decoder_kernel,
            out_shape=(jax.ShapeDtypeStruct((B, 1, L8), jnp.float32),
                       jax.ShapeDtypeStruct((B, 1, L16), jnp.float32),
                       jax.ShapeDtypeStruct((B, 1, 1), jnp.float32)),
            grid=(B,),
            in_specs=[
                pl.BlockSpec((1, N, D), lambda b: (b, 0, 0)),   # image tokens
                pl.BlockSpec((N, D), lambda b: (0, 0)),         # shared pos-enc
                pl.BlockSpec((1, D), lambda b: (0, 0)),         # dense (no-mask)
                pl.BlockSpec((1, S, D), lambda b: (b, 0, 0)),   # prompt tokens
                pl.BlockSpec((D, D), lambda b: (0, 0)),         # wdq
                pl.BlockSpec((D, D), lambda b: (0, 0)),         # wdk
                pl.BlockSpec((D, D), lambda b: (0, 0)),         # wdv
                pl.BlockSpec((D, D), lambda b: (0, 0)),         # w_hyper
                pl.BlockSpec((D, 1), lambda b: (0, 0)),         # w_iou
                pl.BlockSpec((N, L8), lambda b: (0, 0)),        # kron(Lup,Lup)^T
                pl.BlockSpec((L8, L16), lambda b: (0, 0)),      # kron(Lpost,Lpost)^T
            ],
            out_specs=(pl.BlockSpec((1, 1, L8), lambda b: (b, 0, 0)),
                       pl.BlockSpec((1, 1, L16), lambda b: (b, 0, 0)),
                       pl.BlockSpec((1, 1, 1), lambda b: (b, 0, 0))),
            compiler_params=pltpu.CompilerParams(
                dimension_semantics=("parallel",)),
        )(image_embeddings, image_pe_tok, dense_prompt_embeddings,
          sparse_prompt_embeddings, self.params["wdq"], self.params["wdk"],
          self.params["wdv"], self.params["w_hyper"], self.params["w_iou"],
          self.K8T, self.K16T)
        return low_flat, mask_flat, iou.reshape(B, 1)

    # -------- OnePrompt's own methods --------

    def preprocess(self, x):
        x = (x - self.pixel_mean) / self.pixel_std
        h, w = x.shape[-2:]
        padh = self.img_size - h
        padw = self.img_size - w
        return jnp.pad(x, ((0, 0), (0, 0), (0, padh), (0, padw)))

    def postprocess_masks(self, masks, input_size):
        # Standalone equivalent of F.interpolate(..., (img_size, img_size),
        # mode='bilinear', align_corners=False) + crop.  In the forward path
        # this is fused into the mask_decoder Pallas kernel via self.K16T.
        B, C, Hi, Wi = masks.shape
        flat = masks.reshape(B * C, Hi * Wi)
        up = (flat @ self.K16T).reshape(B, C, self.img_size, self.img_size)
        return up[..., :input_size[0], :input_size[1]]

    # -------- jitted forward core --------

    def _forward_impl(self, imgs, tmp_img0, tmp_mask0, coords, labels, has_pt):
        B = imgs.shape[0]
        D, N = self.D, self.N
        if not has_pt:
            tmp_img = jnp.broadcast_to(tmp_img0, (B,) + tmp_img0.shape[1:])
            tmp_mask = jnp.broadcast_to(tmp_mask0, (B,) + tmp_mask0.shape[1:])
            pt, plab = generate_click_prompt2D(tmp_img, tmp_mask)
            coords = pt[:, None, :]
            labels = plab[:, None]
        # frozen image encoder: raw batch + the single template image in ONE
        # fused Pallas call (template encodings are identical across batch, so
        # encode once and broadcast the tokens -- numerically identical).
        stacked = jnp.concatenate([imgs, tmp_img0], axis=0)      # (B+1,C,H,W)
        tok_all, skips_all = self.image_encoder(stacked)
        r_tok = tok_all[:B]
        r_s1, r_s2 = skips_all[0][:B], skips_all[1][:B]
        t_tok = jnp.broadcast_to(tok_all[B:], (B, N, D))
        t_s1 = jnp.broadcast_to(skips_all[0][B:], (B, N, D))
        t_s2 = jnp.broadcast_to(skips_all[1][B:], (B, N, D))

        p1, p2, sparse_embeddings, dense_embeddings = self.prompt_encoder(
            points=(coords, labels), boxes=None, masks=None)

        r_out, mixed_features = self.oneprompt_former(
            skips_raw=[r_s1, r_s2], skips_tmp=[t_s1, t_s2], raw_tok=r_tok,
            tmp_tok=t_tok, pt1=p1, pt2=p2, image_pe_tok=self.pe_tok,
            sparse_prompt_embeddings=sparse_embeddings,
            dense_prompt_embeddings=dense_embeddings, multimask_output=False)

        low_flat, mask_flat, iou_predictions = self.mask_decoder(
            image_embeddings=r_out, image_pe_tok=self.pe_tok,
            sparse_prompt_embeddings=mixed_features,
            dense_prompt_embeddings=dense_embeddings, multimask_output=False)

        low_res = low_flat.reshape(B, 1, self.low_res, self.low_res)
        masks = mask_flat.reshape(B, 1, self.img_size, self.img_size)
        masks = masks[..., :imgs.shape[-2], :imgs.shape[-1]]     # crop padding
        return masks, iou_predictions, low_res

    def __call__(self, batched_input, template_input, multimask_output):
        imgs = jnp.asarray(batched_input["image"], jnp.float32)
        tmp_img0 = jnp.asarray(template_input["image"], jnp.float32)[0:1]
        tmp_mask0 = jnp.asarray(template_input["label"], jnp.float32)[0:1]
        if "pt" in template_input:
            point_labels = np.asarray(template_input["p_label"])
            # TODO(synk): the reference keeps `pt` as a raw array when
            # p_label[0] == -1; the synthetic prompt_encoder only has the
            # (coords, labels) tuple path, so we always form the tuple.
            coords = jnp.asarray(template_input["pt"], jnp.float32)[:, None, :]
            labels = jnp.asarray(point_labels, jnp.int32)[:, None]
            masks, iou, low_res = self._fwd(imgs, tmp_img0, tmp_mask0,
                                            coords, labels, has_pt=True)
        else:
            masks, iou, low_res = self._fwd(imgs, tmp_img0, tmp_mask0,
                                            None, None, has_pt=False)
        return [{"masks": masks,
                 "iou_predictions": iou,
                 "low_res_logits": low_res}]


# ----------------------------- demo -----------------------------

if __name__ == "__main__":
    key = jax.random.PRNGKey(0)
    k_model, k_img, k_lab, k_timg, k_tlab = jax.random.split(key, 5)

    B, C, H, W = 2, 3, 16, 16
    batched_input = {
        "image": 255.0 * jax.random.uniform(k_img, (B, C, H, W), jnp.float32),
        "label": (jax.random.uniform(k_lab, (B, 1, H, W)) > 0.5).astype(jnp.float32),
    }
    template_input = {
        "image": 255.0 * jax.random.uniform(k_timg, (1, C, H, W), jnp.float32),
        "label": (jax.random.uniform(k_tlab, (1, 1, H, W)) > 0.5).astype(jnp.float32),
    }

    model = OnePrompt(k_model, img_size=H, C=C, P=4, D=32)
    outputs = model(batched_input, template_input, multimask_output=False)

    out = outputs[0]
    jax.block_until_ready(out["masks"])
    jax.block_until_ready(out["iou_predictions"])
    jax.block_until_ready(out["low_res_logits"])

    assert out["masks"].shape == (B, 1, H, W)
    assert out["iou_predictions"].shape == (B, 1)
    assert out["low_res_logits"].shape == (B, 1, 8, 8)
    print("KERNEL_OK")
</pallas_src>

<mosaic_0001>
module attributes {stable_mosaic.version = 11 : i64} {
  func.func @_encoder_kernel(%arg0: i32, %arg1: memref<48x48xf32, #tpu.memory_space<vmem>>, %arg2: memref<48x32xbf16, #tpu.memory_space<vmem>>, %arg3: memref<1x32xf32, #tpu.memory_space<vmem>>, %arg4: memref<32x64xbf16, #tpu.memory_space<vmem>>, %arg5: memref<48x96xf32, #tpu.memory_space<vmem>>) attributes {dimension_semantics = [#tpu.dimension_semantics<arbitrary>], iteration_bounds = array<i64: 1>, scalar_prefetch = 0 : i64, scratch_operands = 0 : i64, tpu.core_type = #tpu.core_type<tc>, window_params = [{pipeline_mode = #tpu.pipeline_mode<synchronous>, transform_indices = @transform_0, window_bounds = array<i64: 48, 48>}, {pipeline_mode = #tpu.pipeline_mode<synchronous>, transform_indices = @transform_1, window_bounds = array<i64: 48, 32>}, {pipeline_mode = #tpu.pipeline_mode<synchronous>, transform_indices = @transform_2, window_bounds = array<i64: 1, 32>}, {pipeline_mode = #tpu.pipeline_mode<synchronous>, transform_indices = @transform_3, window_bounds = array<i64: 32, 64>}, {pipeline_mode = #tpu.pipeline_mode<synchronous>, transform_indices = @transform_4, window_bounds = array<i64: 48, 96>}]} {
    %c0 = arith.constant 0 : index
    %c0_0 = arith.constant 0 : index
    %0 = vector.load %arg1[%c0, %c0_0] : memref<48x48xf32, #tpu.memory_space<vmem>>, vector<48x48xf32>
    %1 = arith.truncf %0 : vector<48x48xf32> to vector<48x48xbf16>
    %c0_1 = arith.constant 0 : index
    %c0_2 = arith.constant 0 : index
    %2 = vector.load %arg2[%c0_1, %c0_2] : memref<48x32xbf16, #tpu.memory_space<vmem>>, vector<48x32xbf16>
    %cst = arith.constant dense<0.000000e+00> : vector<48x32xf32>
    %3 = tpu.matmul %1, %2, %cst {dimension_numbers = #tpu.dot_dimension_numbers<[1], [0], [0], [1], [0, 0, 1, 1], [], []>} : vector<48x48xbf16>, vector<48x32xbf16>, vector<48x32xf32> -> vector<48x32xf32>
    %c0_3 = arith.constant 0 : index
    %c0_4 = arith.constant 0 : index
    %4 = vector.load %arg3[%c0_3, %c0_4] : memref<1x32xf32, #tpu.memory_space<vmem>>, vector<1x32xf32>
    %5 = vector.broadcast %4 : vector<1x32xf32> to vector<48x32xf32>
    %6 = arith.addf %3, %5 : vector<48x32xf32>
    %7 = arith.truncf %6 : vector<48x32xf32> to vector<48x32xbf16>
    %c0_5 = arith.constant 0 : index
    %c0_6 = arith.constant 0 : index
    %8 = vector.load %arg4[%c0_5, %c0_6] : memref<32x64xbf16, #tpu.memory_space<vmem>>, vector<32x64xbf16>
    %cst_7 = arith.constant dense<0.000000e+00> : vector<48x64xf32>
    %9 = tpu.matmul %7, %8, %cst_7 {dimension_numbers = #tpu.dot_dimension_numbers<[1], [0], [0], [1], [0, 0, 1, 1], [], []>} : vector<48x32xbf16>, vector<32x64xbf16>, vector<48x64xf32> -> vector<48x64xf32>
    %cst_8 = arith.constant 0.000000e+00 : f32
    %10 = vector.broadcast %cst_8 : f32 to vector<48x64xf32>
    %11 = arith.maximumf %9, %10 : vector<48x64xf32>
    %c0_9 = arith.constant 0 : index
    %c0_10 = arith.constant 0 : index
    %12 = vector.load %arg5[%c0_9, %c0_10] : memref<48x96xf32, #tpu.memory_space<vmem>>, vector<48x32xf32>
    tpu.vector_store %arg5[%c0_9, %c0_10], %6 {strides = array<i32>} : memref<48x96xf32, #tpu.memory_space<vmem>>, vector<48x32xf32>,
    %c0_11 = arith.constant 0 : index
    %c32 = arith.constant 32 : index
    %13 = vector.load %arg5[%c0_11, %c32] : memref<48x96xf32, #tpu.memory_space<vmem>>, vector<48x64xf32>
    tpu.vector_store %arg5[%c0_11, %c32], %11 {strides = array<i32>} : memref<48x96xf32, #tpu.memory_space<vmem>>, vector<48x64xf32>,
    return
  }
  func.func @transform_0(%arg0: i32) -> (i32, i32) {
    %c0_i32 = arith.constant 0 : i32
    %c0_i32_0 = arith.constant 0 : i32
    %c0_i32_1 = arith.constant 0 : i32
    return %c0_i32, %c0_i32_0 : i32, i32
  }
  func.func @transform_1(%arg0: i32) -> (i32, i32) {
    %c0_i32 = arith.constant 0 : i32
    %c0_i32_0 = arith.constant 0 : i32
    %c0_i32_1 = arith.constant 0 : i32
    return %c0_i32, %c0_i32_0 : i32, i32
  }
  func.func @transform_2(%arg0: i32) -> (i32, i32) {
    %c0_i32 = arith.constant 0 : i32
    %c0_i32_0 = arith.constant 0 : i32
    %c0_i32_1 = arith.constant 0 : i32
    return %c0_i32, %c0_i32_0 : i32, i32
  }
  func.func @transform_3(%arg0: i32) -> (i32, i32) {
    %c0_i32 = arith.constant 0 : i32
    %c0_i32_0 = arith.constant 0 : i32
    %c0_i32_1 = arith.constant 0 : i32
    return %c0_i32, %c0_i32_0 : i32, i32
  }
  func.func @transform_4(%arg0: i32) -> (i32, i32) {
    %c0_i32 = arith.constant 0 : i32
    %c0_i32_0 = arith.constant 0 : i32
    %c0_i32_1 = arith.constant 0 : i32
    return %c0_i32, %c0_i32_0 : i32, i32
  }
}

module attributes {stable_mosaic.version = 11 : i64} {
  func.func @_former_kernel(%arg0: i32, %arg1: memref<1x16x32xf32, #tpu.memory_space<vmem>>, %arg2: memref<1x16x32xf32, #tpu.memory_space<vmem>>, %arg3: memref<16x32xf32, #tpu.memory_space<vmem>>, %arg4: memref<1x52x32xf32, #tpu.memory_space<vmem>>, %arg5: memref<1x2x32xf32, #tpu.memory_space<vmem>>, %arg6: memref<32x32xbf16, #tpu.memory_space<vmem>>, %arg7: memref<32x64xbf16, #tpu.memory_space<vmem>>, %arg8: memref<32x32xbf16, #tpu.memory_space<vmem>>, %arg9: memref<32x32xbf16, #tpu.memory_space<vmem>>, %arg10: memref<1x16x32xf32, #tpu.memory_space<vmem>>, %arg11: memref<1x2x32xf32, #tpu.memory_space<vmem>>) attributes {dimension_semantics = [#tpu.dimension_semantics<parallel>], iteration_bounds = array<i64: 2>, scalar_prefetch = 0 : i64, scratch_operands = 0 : i64, tpu.core_type = #tpu.core_type<tc>, window_params = [{transform_indices = @transform_0, window_bounds = array<i64: 1, 16, 32>}, {transform_indices = @transform_1, window_bounds = array<i64: 1, 16, 32>}, {pipeline_mode = #tpu.pipeline_mode<synchronous>, transform_indices = @transform_2, window_bounds = array<i64: 16, 32>}, {transform_indices = @transform_3, window_bounds = array<i64: 1, 52, 32>}, {transform_indices = @transform_4, window_bounds = array<i64: 1, 2, 32>}, {pipeline_mode = #tpu.pipeline_mode<synchronous>, transform_indices = @transform_5, window_bounds = array<i64: 32, 32>}, {pipeline_mode = #tpu.pipeline_mode<synchronous>, transform_indices = @transform_6, window_bounds = array<i64: 32, 64>}, {pipeline_mode = #tpu.pipeline_mode<synchronous>, transform_indices = @transform_7, window_bounds = array<i64: 32, 32>}, {pipeline_mode = #tpu.pipeline_mode<synchronous>, transform_indices = @transform_8, window_bounds = array<i64: 32, 32>}, {transform_indices = @transform_9, window_bounds = array<i64: 1, 16, 32>}, {transform_indices = @transform_10, window_bounds = array<i64: 1, 2, 32>}]} {
    %c0 = arith.constant 0 : index
    %c0_0 = arith.constant 0 : index
    %c0_1 = arith.constant 0 : index
    %0 = vector.load %arg1[%c0, %c0_0, %c0_1] : memref<1x16x32xf32, #tpu.memory_space<vmem>>, vector<1x16x32xf32>
    %1 = vector.shape_cast %0 : vector<1x16x32xf32> to vector<16x32xf32>
    %c0_2 = arith.constant 0 : index
    %c0_3 = arith.constant 0 : index
    %2 = vector.load %arg3[%c0_2, %c0_3] : memref<16x32xf32, #tpu.memory_space<vmem>>, vector<16x32xf32>
    %3 = arith.addf %1, %2 : vector<16x32xf32>
    %c0_4 = arith.constant 0 : index
    %c0_5 = arith.constant 0 : index
    %c0_6 = arith.constant 0 : index
    %4 = vector.load %arg2[%c0_4, %c0_5, %c0_6] : memref<1x16x32xf32, #tpu.memory_space<vmem>>, vector<1x16x32xf32>
    %5 = vector.shape_cast %4 : vector<1x16x32xf32> to vector<16x32xf32>
    %6 = arith.addf %3, %5 : vector<16x32xf32>
    %7 = arith.truncf %6 : vector<16x32xf32> to vector<16x32xbf16>
    %c0_7 = arith.constant 0 : index
    %c0_8 = arith.constant 0 : index
    %c0_9 = arith.constant 0 : index
    %8 = vector.load %arg4[%c0_7, %c0_8, %c0_9] : memref<1x52x32xf32, #tpu.memory_space<vmem>>, vector<1x52x32xf32>
    %9 = vector.shape_cast %8 : vector<1x52x32xf32> to vector<52x32xf32>
    %10 = arith.truncf %9 : vector<52x32xf32> to vector<52x32xbf16>
    %c0_10 = arith.constant 0 : index
    %c0_11 = arith.constant 0 : index
    %11 = vector.load %arg6[%c0_10, %c0_11] : memref<32x32xbf16, #tpu.memory_space<vmem>>, vector<32x32xbf16>
    %cst = arith.constant dense<0.000000e+00> : vector<16x32xf32>
    %12 = tpu.matmul %7, %11, %cst {dimension_numbers = #tpu.dot_dimension_numbers<[1], [0], [0], [1], [0, 0, 1, 1], [], []>} : vector<16x32xbf16>, vector<32x32xbf16>, vector<16x32xf32> -> vector<16x32xf32>
    %c0_12 = arith.constant 0 : index
    %c0_13 = arith.constant 0 : index
    %13 = vector.load %arg7[%c0_12, %c0_13] : memref<32x64xbf16, #tpu.memory_space<vmem>>, vector<32x64xbf16>
    %cst_14 = arith.constant dense<0.000000e+00> : vector<52x64xf32>
    %14 = tpu.matmul %10, %13, %cst_14 {dimension_numbers = #tpu.dot_dimension_numbers<[1], [0], [0], [1], [0, 0, 1, 1], [], []>} : vector<52x32xbf16>, vector<32x64xbf16>, vector<52x64xf32> -> vector<52x64xf32>
    %15 = vector.extract_strided_slice %14 {offsets = [0, 0], sizes = [52, 32], strides = [1, 1]} : vector<52x64xf32> to vector<52x32xf32>
    %16 = vector.extract_strided_slice %14 {offsets = [0, 32], sizes = [52, 32], strides = [1, 1]} : vector<52x64xf32> to vector<52x32xf32>
    %17 = arith.truncf %12 : vector<16x32xf32> to vector<16x32xbf16>
    %18 = arith.truncf %15 : vector<52x32xf32> to vector<52x32xbf16>
    %cst_15 = arith.constant dense<0.000000e+00> : vector<16x52xf32>
    %19 = tpu.matmul %17, %18, %cst_15 {dimension_numbers = #tpu.dot_dimension_numbers<[1], [1], [0], [0], [0, 0, 1, 0], [], []>} : vector<16x32xbf16>, vector<52x32xbf16>, vector<16x52xf32> -> vector<16x52xf32>
    %cst_16 = arith.constant 0.176776692 : f32
    %20 = vector.broadcast %cst_16 : f32 to vector<16x52xf32>
    %21 = arith.mulf %19, %20 : vector<16x52xf32>
    %cst_17 = arith.constant dense<0xFF800000> : vector<16xf32>
    %22 = vector.multi_reduction <maximumf>, %21, %cst_17 [1] : vector<16x52xf32> to vector<16xf32>
    %23 = vector.shape_cast %22 : vector<16xf32> to vector<16x1xf32>
    %24 = vector.broadcast %23 : vector<16x1xf32> to vector<16x52xf32>
    %25 = arith.subf %21, %24 : vector<16x52xf32>
    %26 = math.exp %25 : vector<16x52xf32>
    %cst_18 = arith.constant dense<0.000000e+00> : vector<16xf32>
    %27 = vector.multi_reduction <add>, %26, %cst_18 [1] : vector<16x52xf32> to vector<16xf32>
    %28 = vector.shape_cast %27 : vector<16xf32> to vector<16x1xf32>
    %29 = tpu.reciprocal %28 {approx = true} : vector<16x1xf32> -> vector<16x1xf32>
    %30 = vector.broadcast %29 : vector<16x1xf32> to vector<16x52xf32>
    %31 = arith.mulf %26, %30 : vector<16x52xf32>
    %32 = arith.truncf %31 : vector<16x52xf32> to vector<16x52xbf16>
    %33 = arith.truncf %16 : vector<52x32xf32> to vector<52x32xbf16>
    %cst_19 = arith.constant dense<0.000000e+00> : vector<16x32xf32>
    %34 = tpu.matmul %32, %33, %cst_19 {dimension_numbers = #tpu.dot_dimension_numbers<[1], [0], [0], [1], [0, 0, 1, 1], [], []>} : vector<16x52xbf16>, vector<52x32xbf16>, vector<16x32xf32> -> vector<16x32xf32>
    %35 = arith.truncf %34 : vector<16x32xf32> to vector<16x32xbf16>
    %c0_20 = arith.constant 0 : index
    %c0_21 = arith.constant 0 : index
    %36 = vector.load %arg8[%c0_20, %c0_21] : memref<32x32xbf16, #tpu.memory_space<vmem>>, vector<32x32xbf16>
    %cst_22 = arith.constant dense<0.000000e+00> : vector<16x32xf32>
    %37 = tpu.matmul %35, %36, %cst_22 {dimension_numbers = #tpu.dot_dimension_numbers<[1], [0], [0], [1], [0, 0, 1, 1], [], []>} : vector<16x32xbf16>, vector<32x32xbf16>, vector<16x32xf32> -> vector<16x32xf32>
    %38 = arith.addf %1, %37 : vector<16x32xf32>
    %c0_23 = arith.constant 0 : index
    %c0_24 = arith.constant 0 : index
    %c0_25 = arith.constant 0 : index
    %39 = vector.load %arg10[%c0_23, %c0_24, %c0_25] : memref<1x16x32xf32, #tpu.memory_space<vmem>>, vector<1x16x32xf32>
    %40 = vector.shape_cast %39 : vector<1x16x32xf32> to vector<16x32xf32>
    %41 = vector.shape_cast %38 : vector<16x32xf32> to vector<1x16x32xf32>
    tpu.vector_store %arg10[%c0_23, %c0_24, %c0_25], %41 {strides = array<i32>} : memref<1x16x32xf32, #tpu.memory_space<vmem>>, vector<1x16x32xf32>,
    %c0_26 = arith.constant 0 : index
    %c0_27 = arith.constant 0 : index
    %c0_28 = arith.constant 0 : index
    %42 = vector.load %arg5[%c0_26, %c0_27, %c0_28] : memref<1x2x32xf32, #tpu.memory_space<vmem>>, vector<1x2x32xf32>
    %43 = vector.shape_cast %42 : vector<1x2x32xf32> to vector<2x32xf32>
    %44 = arith.truncf %43 : vector<2x32xf32> to vector<2x32xbf16>
    %c0_29 = arith.constant 0 : index
    %c0_30 = arith.constant 0 : index
    %45 = vector.load %arg9[%c0_29, %c0_30] : memref<32x32xbf16, #tpu.memory_space<vmem>>, vector<32x32xbf16>
    %cst_31 = arith.constant dense<0.000000e+00> : vector<2x32xf32>
    %46 = tpu.matmul %44, %45, %cst_31 {dimension_numbers = #tpu.dot_dimension_numbers<[1], [0], [0], [1], [0, 0, 1, 1], [], []>} : vector<2x32xbf16>, vector<32x32xbf16>, vector<2x32xf32> -> vector<2x32xf32>
    %47 = arith.addf %43, %46 : vector<2x32xf32>
    %c0_32 = arith.constant 0 : index
    %c0_33 = arith.constant 0 : index
    %c0_34 = arith.constant 0 : index
    %48 = vector.load %arg11[%c0_32, %c0_33, %c0_34] : memref<1x2x32xf32, #tpu.memory_space<vmem>>, vector<1x2x32xf32>
    %49 = vector.shape_cast %48 : vector<1x2x32xf32> to vector<2x32xf32>
    %50 = vector.shape_cast %47 : vector<2x32xf32> to vector<1x2x32xf32>
    tpu.vector_store %arg11[%c0_32, %c0_33, %c0_34], %50 {strides = array<i32>} : memref<1x2x32xf32, #tpu.memory_space<vmem>>, vector<1x2x32xf32>,
    return
  }
  func.func @transform_0(%arg0: i32) -> (i32, i32, i32) {
    %c0_i32 = arith.constant 0 : i32
    %c0_i32_0 = arith.constant 0 : i32
    %c0_i32_1 = arith.constant 0 : i32
    return %arg0, %c0_i32, %c0_i32_0 : i32, i32, i32
  }
  func.func @transform_1(%arg0: i32) -> (i32, i32, i32) {
    %c0_i32 = arith.constant 0 : i32
    %c0_i32_0 = arith.constant 0 : i32
    %c0_i32_1 = arith.constant 0 : i32
    return %arg0, %c0_i32, %c0_i32_0 : i32, i32, i32
  }
  func.func @transform_2(%arg0: i32) -> (i32, i32) {
    %c0_i32 = arith.constant 0 : i32
    %c0_i32_0 = arith.constant 0 : i32
    %c0_i32_1 = arith.constant 0 : i32
    return %c0_i32, %c0_i32_0 : i32, i32
  }
  func.func @transform_3(%arg0: i32) -> (i32, i32, i32) {
    %c0_i32 = arith.constant 0 : i32
    %c0_i32_0 = arith.constant 0 : i32
    %c0_i32_1 = arith.constant 0 : i32
    return %arg0, %c0_i32, %c0_i32_0 : i32, i32, i32
  }
  func.func @transform_4(%arg0: i32) -> (i32, i32, i32) {
    %c0_i32 = arith.constant 0 : i32
    %c0_i32_0 = arith.constant 0 : i32
    %c0_i32_1 = arith.constant 0 : i32
    return %arg0, %c0_i32, %c0_i32_0 : i32, i32, i32
  }
  func.func @transform_5(%arg0: i32) -> (i32, i32) {
    %c0_i32 = arith.constant 0 : i32
    %c0_i32_0 = arith.constant 0 : i32
    %c0_i32_1 = arith.constant 0 : i32
    return %c0_i32, %c0_i32_0 : i32, i32
  }
  func.func @transform_6(%arg0: i32) -> (i32, i32) {
    %c0_i32 = arith.constant 0 : i32
    %c0_i32_0 = arith.constant 0 : i32
    %c0_i32_1 = arith.constant 0 : i32
    return %c0_i32, %c0_i32_0 : i32, i32
  }
  func.func @transform_7(%arg0: i32) -> (i32, i32) {
    %c0_i32 = arith.constant 0 : i32
    %c0_i32_0 = arith.constant 0 : i32
    %c0_i32_1 = arith.constant 0 : i32
    return %c0_i32, %c0_i32_0 : i32, i32
  }
  func.func @transform_8(%arg0: i32) -> (i32, i32) {
    %c0_i32 = arith.constant 0 : i32
    %c0_i32_0 = arith.constant 0 : i32
    %c0_i32_1 = arith.constant 0 : i32
    return %c0_i32, %c0_i32_0 : i32, i32
  }
  func.func @transform_9(%arg0: i32) -> (i32, i32, i32) {
    %c0_i32 = arith.constant 0 : i32
    %c0_i32_0 = arith.constant 0 : i32
    %c0_i32_1 = arith.constant 0 : i32
    return %arg0, %c0_i32, %c0_i32_0 : i32, i32, i32
  }
  func.func @transform_10(%arg0: i32) -> (i32, i32, i32) {
    %c0_i32 = arith.constant 0 : i32
    %c0_i32_0 = arith.constant 0 : i32
    %c0_i32_1 = arith.constant 0 : i32
    return %arg0, %c0_i32, %c0_i32_0 : i32, i32, i32
  }
}

module attributes {stable_mosaic.version = 11 : i64} {
  func.func @_decoder_kernel(%arg0: i32, %arg1: memref<1x16x32xf32, #tpu.memory_space<vmem>>, %arg2: memref<16x32xf32, #tpu.memory_space<vmem>>, %arg3: memref<1x32xf32, #tpu.memory_space<vmem>>, %arg4: memref<1x2x32xf32, #tpu.memory_space<vmem>>, %arg5: memref<32x32xbf16, #tpu.memory_space<vmem>>, %arg6: memref<32x32xbf16, #tpu.memory_space<vmem>>, %arg7: memref<32x32xbf16, #tpu.memory_space<vmem>>, %arg8: memref<32x32xbf16, #tpu.memory_space<vmem>>, %arg9: memref<32x1xbf16, #tpu.memory_space<vmem>>, %arg10: memref<16x64xf32, #tpu.memory_space<vmem>>, %arg11: memref<64x256xf32, #tpu.memory_space<vmem>>, %arg12: memref<1x1x64xf32, #tpu.memory_space<vmem>>, %arg13: memref<1x1x256xf32, #tpu.memory_space<vmem>>, %arg14: memref<1x1x1xf32, #tpu.memory_space<vmem>>) attributes {dimension_semantics = [#tpu.dimension_semantics<parallel>], iteration_bounds = array<i64: 2>, scalar_prefetch = 0 : i64, scratch_operands = 0 : i64, tpu.core_type = #tpu.core_type<tc>, window_params = [{transform_indices = @transform_0, window_bounds = array<i64: 1, 16, 32>}, {pipeline_mode = #tpu.pipeline_mode<synchronous>, transform_indices = @transform_1, window_bounds = array<i64: 16, 32>}, {pipeline_mode = #tpu.pipeline_mode<synchronous>, transform_indices = @transform_2, window_bounds = array<i64: 1, 32>}, {transform_indices = @transform_3, window_bounds = array<i64: 1, 2, 32>}, {pipeline_mode = #tpu.pipeline_mode<synchronous>, transform_indices = @transform_4, window_bounds = array<i64: 32, 32>}, {pipeline_mode = #tpu.pipeline_mode<synchronous>, transform_indices = @transform_5, window_bounds = array<i64: 32, 32>}, {pipeline_mode = #tpu.pipeline_mode<synchronous>, transform_indices = @transform_6, window_bounds = array<i64: 32, 32>}, {pipeline_mode = #tpu.pipeline_mode<synchronous>, transform_indices = @transform_7, window_bounds = array<i64: 32, 32>}, {pipeline_mode = #tpu.pipeline_mode<synchronous>, transform_indices = @transform_8, window_bounds = array<i64: 32, 1>}, {pipeline_mode = #tpu.pipeline_mode<synchronous>, transform_indices = @transform_9, window_bounds = array<i64: 16, 64>}, {pipeline_mode = #tpu.pipeline_mode<synchronous>, transform_indices = @transform_10, window_bounds = array<i64: 64, 256>}, {transform_indices = @transform_11, window_bounds = array<i64: 1, 1, 64>}, {transform_indices = @transform_12, window_bounds = array<i64: 1, 1, 256>}, {transform_indices = @transform_13, window_bounds = array<i64: 1, 1, 1>}]} {
    %c0 = arith.constant 0 : index
    %c0_0 = arith.constant 0 : index
    %c0_1 = arith.constant 0 : index
    %0 = vector.load %arg1[%c0, %c0_0, %c0_1] : memref<1x16x32xf32, #tpu.memory_space<vmem>>, vector<1x16x32xf32>
    %1 = vector.shape_cast %0 : vector<1x16x32xf32> to vector<16x32xf32>
    %c0_2 = arith.constant 0 : index
    %c0_3 = arith.constant 0 : index
    %2 = vector.load %arg3[%c0_2, %c0_3] : memref<1x32xf32, #tpu.memory_space<vmem>>, vector<1x32xf32>
    %3 = vector.broadcast %2 : vector<1x32xf32> to vector<16x32xf32>
    %4 = arith.addf %1, %3 : vector<16x32xf32>
    %5 = arith.truncf %4 : vector<16x32xf32> to vector<16x32xbf16>
    %c0_4 = arith.constant 0 : index
    %c0_5 = arith.constant 0 : index
    %6 = vector.load %arg2[%c0_4, %c0_5] : memref<16x32xf32, #tpu.memory_space<vmem>>, vector<16x32xf32>
    %7 = arith.addf %4, %6 : vector<16x32xf32>
    %8 = arith.truncf %7 : vector<16x32xf32> to vector<16x32xbf16>
    %c0_6 = arith.constant 0 : index
    %c0_7 = arith.constant 0 : index
    %c0_8 = arith.constant 0 : index
    %9 = vector.load %arg4[%c0_6, %c0_7, %c0_8] : memref<1x2x32xf32, #tpu.memory_space<vmem>>, vector<1x2x32xf32>
    %10 = vector.shape_cast %9 : vector<1x2x32xf32> to vector<2x32xf32>
    %11 = arith.truncf %10 : vector<2x32xf32> to vector<2x32xbf16>
    %c0_9 = arith.constant 0 : index
    %c0_10 = arith.constant 0 : index
    %12 = vector.load %arg5[%c0_9, %c0_10] : memref<32x32xbf16, #tpu.memory_space<vmem>>, vector<32x32xbf16>
    %cst = arith.constant dense<0.000000e+00> : vector<2x32xf32>
    %13 = tpu.matmul %11, %12, %cst {dimension_numbers = #tpu.dot_dimension_numbers<[1], [0], [0], [1], [0, 0, 1, 1], [], []>} : vector<2x32xbf16>, vector<32x32xbf16>, vector<2x32xf32> -> vector<2x32xf32>
    %c0_11 = arith.constant 0 : index
    %c0_12 = arith.constant 0 : index
    %14 = vector.load %arg6[%c0_11, %c0_12] : memref<32x32xbf16, #tpu.memory_space<vmem>>, vector<32x32xbf16>
    %cst_13 = arith.constant dense<0.000000e+00> : vector<16x32xf32>
    %15 = tpu.matmul %8, %14, %cst_13 {dimension_numbers = #tpu.dot_dimension_numbers<[1], [0], [0], [1], [0, 0, 1, 1], [], []>} : vector<16x32xbf16>, vector<32x32xbf16>, vector<16x32xf32> -> vector<16x32xf32>
    %c0_14 = arith.constant 0 : index
    %c0_15 = arith.constant 0 : index
    %16 = vector.load %arg7[%c0_14, %c0_15] : memref<32x32xbf16, #tpu.memory_space<vmem>>, vector<32x32xbf16>
    %cst_16 = arith.constant dense<0.000000e+00> : vector<16x32xf32>
    %17 = tpu.matmul %5, %16, %cst_16 {dimension_numbers = #tpu.dot_dimension_numbers<[1], [0], [0], [1], [0, 0, 1, 1], [], []>} : vector<16x32xbf16>, vector<32x32xbf16>, vector<16x32xf32> -> vector<16x32xf32>
    %18 = arith.truncf %13 : vector<2x32xf32> to vector<2x32xbf16>
    %19 = arith.truncf %15 : vector<16x32xf32> to vector<16x32xbf16>
    %cst_17 = arith.constant dense<0.000000e+00> : vector<2x16xf32>
    %20 = tpu.matmul %18, %19, %cst_17 {dimension_numbers = #tpu.dot_dimension_numbers<[1], [1], [0], [0], [0, 0, 1, 0], [], []>} : vector<2x32xbf16>, vector<16x32xbf16>, vector<2x16xf32> -> vector<2x16xf32>
    %cst_18 = arith.constant 0.176776692 : f32
    %21 = vector.broadcast %cst_18 : f32 to vector<2x16xf32>
    %22 = arith.mulf %20, %21 : vector<2x16xf32>
    %cst_19 = arith.constant dense<0xFF800000> : vector<2xf32>
    %23 = vector.multi_reduction <maximumf>, %22, %cst_19 [1] : vector<2x16xf32> to vector<2xf32>
    %24 = vector.shape_cast %23 : vector<2xf32> to vector<2x1xf32>
    %25 = vector.broadcast %24 : vector<2x1xf32> to vector<2x16xf32>
    %26 = arith.subf %22, %25 : vector<2x16xf32>
    %27 = math.exp %26 : vector<2x16xf32>
    %cst_20 = arith.constant dense<0.000000e+00> : vector<2xf32>
    %28 = vector.multi_reduction <add>, %27, %cst_20 [1] : vector<2x16xf32> to vector<2xf32>
    %29 = vector.shape_cast %28 : vector<2xf32> to vector<2x1xf32>
    %30 = tpu.reciprocal %29 {approx = true} : vector<2x1xf32> -> vector<2x1xf32>
    %31 = vector.broadcast %30 : vector<2x1xf32> to vector<2x16xf32>
    %32 = arith.mulf %27, %31 : vector<2x16xf32>
    %33 = arith.truncf %32 : vector<2x16xf32> to vector<2x16xbf16>
    %34 = arith.truncf %17 : vector<16x32xf32> to vector<16x32xbf16>
    %cst_21 = arith.constant dense<0.000000e+00> : vector<2x32xf32>
    %35 = tpu.matmul %33, %34, %cst_21 {dimension_numbers = #tpu.dot_dimension_numbers<[1], [0], [0], [1], [0, 0, 1, 1], [], []>} : vector<2x16xbf16>, vector<16x32xbf16>, vector<2x32xf32> -> vector<2x32xf32>
    %36 = vector.extract_strided_slice %35 {offsets = [0, 0], sizes = [1, 32], strides = [1, 1]} : vector<2x32xf32> to vector<1x32xf32>
    %37 = arith.truncf %36 : vector<1x32xf32> to vector<1x32xbf16>
    %c0_22 = arith.constant 0 : index
    %c0_23 = arith.constant 0 : index
    %38 = vector.load %arg8[%c0_22, %c0_23] : memref<32x32xbf16, #tpu.memory_space<vmem>>, vector<32x32xbf16>
    %cst_24 = arith.constant dense<0.000000e+00> : vector<1x32xf32>
    %39 = tpu.matmul %37, %38, %cst_24 {dimension_numbers = #tpu.dot_dimension_numbers<[1], [0], [0], [1], [0, 0, 1, 1], [], []>} : vector<1x32xbf16>, vector<32x32xbf16>, vector<1x32xf32> -> vector<1x32xf32>
    %c0_25 = arith.constant 0 : index
    %c0_26 = arith.constant 0 : index
    %40 = vector.load %arg9[%c0_25, %c0_26] : memref<32x1xbf16, #tpu.memory_space<vmem>>, vector<32x1xbf16>
    %cst_27 = arith.constant dense<0.000000e+00> : vector<1x1xf32>
    %41 = tpu.matmul %37, %40, %cst_27 {dimension_numbers = #tpu.dot_dimension_numbers<[1], [0], [0], [1], [0, 0, 1, 1], [], []>} : vector<1x32xbf16>, vector<32x1xbf16>, vector<1x1xf32> -> vector<1x1xf32>
    %c0_28 = arith.constant 0 : index
    %c0_29 = arith.constant 0 : index
    %c0_30 = arith.constant 0 : index
    %42 = vector.load %arg14[%c0_28, %c0_29, %c0_30] : memref<1x1x1xf32, #tpu.memory_space<vmem>>, vector<1x1x1xf32>
    %43 = vector.shape_cast %42 : vector<1x1x1xf32> to vector<1x1xf32>
    %44 = vector.shape_cast %41 : vector<1x1xf32> to vector<1x1x1xf32>
    tpu.vector_store %arg14[%c0_28, %c0_29, %c0_30], %44 {strides = array<i32>} : memref<1x1x1xf32, #tpu.memory_space<vmem>>, vector<1x1x1xf32>,
    %cst_31 = arith.constant dense<0.000000e+00> : vector<1x16xf32>
    %45 = tpu.matmul %39, %4, %cst_31 {dimension_numbers = #tpu.dot_dimension_numbers<[1], [1], [0], [0], [0, 0, 1, 0], [], []>} : vector<1x32xf32>, vector<16x32xf32>, vector<1x16xf32> -> vector<1x16xf32>
    %c0_32 = arith.constant 0 : index
    %c0_33 = arith.constant 0 : index
    %46 = vector.load %arg10[%c0_32, %c0_33] : memref<16x64xf32, #tpu.memory_space<vmem>>, vector<16x64xf32>
    %cst_34 = arith.constant dense<0.000000e+00> : vector<1x64xf32>
    %47 = tpu.matmul %45, %46, %cst_34 {dimension_numbers = #tpu.dot_dimension_numbers<[1], [0], [0], [1], [0, 0, 1, 1], [], []>} : vector<1x16xf32>, vector<16x64xf32>, vector<1x64xf32> -> vector<1x64xf32>
    %c0_35 = arith.constant 0 : index
    %c0_36 = arith.constant 0 : index
    %c0_37 = arith.constant 0 : index
    %48 = vector.load %arg12[%c0_35, %c0_36, %c0_37] : memref<1x1x64xf32, #tpu.memory_space<vmem>>, vector<1x1x64xf32>
    %49 = vector.shape_cast %48 : vector<1x1x64xf32> to vector<1x64xf32>
    %50 = vector.shape_cast %47 : vector<1x64xf32> to vector<1x1x64xf32>
    tpu.vector_store %arg12[%c0_35, %c0_36, %c0_37], %50 {strides = array<i32>} : memref<1x1x64xf32, #tpu.memory_space<vmem>>, vector<1x1x64xf32>,
    %c0_38 = arith.constant 0 : index
    %c0_39 = arith.constant 0 : index
    %51 = vector.load %arg11[%c0_38, %c0_39] : memref<64x256xf32, #tpu.memory_space<vmem>>, vector<64x256xf32>
    %cst_40 = arith.constant dense<0.000000e+00> : vector<1x256xf32>
    %52 = tpu.matmul %47, %51, %cst_40 {dimension_numbers = #tpu.dot_dimension_numbers<[1], [0], [0], [1], [0, 0, 1, 1], [], []>} : vector<1x64xf32>, vector<64x256xf32>, vector<1x256xf32> -> vector<1x256xf32>
    %c0_41 = arith.constant 0 : index
    %c0_42 = arith.constant 0 : index
    %c0_43 = arith.constant 0 : index
    %53 = vector.load %arg13[%c0_41, %c0_42, %c0_43] : memref<1x1x256xf32, #tpu.memory_space<vmem>>, vector<1x1x256xf32>
    %54 = vector.shape_cast %53 : vector<1x1x256xf32> to vector<1x256xf32>
    %55 = vector.shape_cast %52 : vector<1x256xf32> to vector<1x1x256xf32>
    tpu.vector_store %arg13[%c0_41, %c0_42, %c0_43], %55 {strides = array<i32>} : memref<1x1x256xf32, #tpu.memory_space<vmem>>, vector<1x1x256xf32>,
    return
  }
  func.func @transform_0(%arg0: i32) -> (i32, i32, i32) {
    %c0_i32 = arith.constant 0 : i32
    %c0_i32_0 = arith.constant 0 : i32
    %c0_i32_1 = arith.constant 0 : i32
    return %arg0, %c0_i32, %c0_i32_0 : i32, i32, i32
  }
  func.func @transform_1(%arg0: i32) -> (i32, i32) {
    %c0_i32 = arith.constant 0 : i32
    %c0_i32_0 = arith.constant 0 : i32
    %c0_i32_1 = arith.constant 0 : i32
    return %c0_i32, %c0_i32_0 : i32, i32
  }
  func.func @transform_2(%arg0: i32) -> (i32, i32) {
    %c0_i32 = arith.constant 0 : i32
    %c0_i32_0 = arith.constant 0 : i32
    %c0_i32_1 = arith.constant 0 : i32
    return %c0_i32, %c0_i32_0 : i32, i32
  }
  func.func @transform_3(%arg0: i32) -> (i32, i32, i32) {
    %c0_i32 = arith.constant 0 : i32
    %c0_i32_0 = arith.constant 0 : i32
    %c0_i32_1 = arith.constant 0 : i32
    return %arg0, %c0_i32, %c0_i32_0 : i32, i32, i32
  }
  func.func @transform_4(%arg0: i32) -> (i32, i32) {
    %c0_i32 = arith.constant 0 : i32
    %c0_i32_0 = arith.constant 0 : i32
    %c0_i32_1 = arith.constant 0 : i32
    return %c0_i32, %c0_i32_0 : i32, i32
  }
  func.func @transform_5(%arg0: i32) -> (i32, i32) {
    %c0_i32 = arith.constant 0 : i32
    %c0_i32_0 = arith.constant 0 : i32
    %c0_i32_1 = arith.constant 0 : i32
    return %c0_i32, %c0_i32_0 : i32, i32
  }
  func.func @transform_6(%arg0: i32) -> (i32, i32) {
    %c0_i32 = arith.constant 0 : i32
    %c0_i32_0 = arith.constant 0 : i32
    %c0_i32_1 = arith.constant 0 : i32
    return %c0_i32, %c0_i32_0 : i32, i32
  }
  func.func @transform_7(%arg0: i32) -> (i32, i32) {
    %c0_i32 = arith.constant 0 : i32
    %c0_i32_0 = arith.constant 0 : i32
    %c0_i32_1 = arith.constant 0 : i32
    return %c0_i32, %c0_i32_0 : i32, i32
  }
  func.func @transform_8(%arg0: i32) -> (i32, i32) {
    %c0_i32 = arith.constant 0 : i32
    %c0_i32_0 = arith.constant 0 : i32
    %c0_i32_1 = arith.constant 0 : i32
    return %c0_i32, %c0_i32_0 : i32, i32
  }
  func.func @transform_9(%arg0: i32) -> (i32, i32) {
    %c0_i32 = arith.constant 0 : i32
    %c0_i32_0 = arith.constant 0 : i32
    %c0_i32_1 = arith.constant 0 : i32
    return %c0_i32, %c0_i32_0 : i32, i32
  }
  func.func @transform_10(%arg0: i32) -> (i32, i32) {
    %c0_i32 = arith.constant 0 : i32
    %c0_i32_0 = arith.constant 0 : i32
    %c0_i32_1 = arith.constant 0 : i32
    return %c0_i32, %c0_i32_0 : i32, i32
  }
  func.func @transform_11(%arg0: i32) -> (i32, i32, i32) {
    %c0_i32 = arith.constant 0 : i32
    %c0_i32_0 = arith.constant 0 : i32
    %c0_i32_1 = arith.constant 0 : i32
    return %arg0, %c0_i32, %c0_i32_0 : i32, i32, i32
  }
  func.func @transform_12(%arg0: i32) -> (i32, i32, i32) {
    %c0_i32 = arith.constant 0 : i32
    %c0_i32_0 = arith.constant 0 : i32
    %c0_i32_1 = arith.constant 0 : i32
    return %arg0, %c0_i32, %c0_i32_0 : i32, i32, i32
  }
  func.func @transform_13(%arg0: i32) -> (i32, i32, i32) {
    %c0_i32 = arith.constant 0 : i32
    %c0_i32_0 = arith.constant 0 : i32
    %c0_i32_1 = arith.constant 0 : i32
    return %arg0, %c0_i32, %c0_i32_0 : i32, i32, i32
  }
}

</mosaic_0001>

<llo_original>
// kernel: _forward_impl.3
$region0: #{_forward_impl.3}
  #allocation0 [shape = 'u32[]', space=smem, size = 0x4, offset = 0x4, fixed_abs, tag = 'smem constant byte address 0x4 - core index']
  #allocation1 [shape = 'u32[72,128]{1,0:T(1,128)}', space=vmem, size = 0x9000, scoped, tag = 'internal scratch']
  %s0 = inlined_call_operand.vmem [shape: f32[48,48], index: 0, kind: input, shape index: {}]
  %s1 = inlined_call_operand.vmem [shape: bf16[48,32], index: 1, kind: input, shape index: {}]
  %s2 = inlined_call_operand.vmem [shape: f32[1,32], index: 2, kind: input, shape index: {}]
  %s3 = inlined_call_operand.vmem [shape: bf16[32,64], index: 3, kind: input, shape index: {}]
  %s4 = inlined_call_operand.vmem [shape: f32[48,96], index: 4, kind: output, shape index: {}]
  %s5 = sld [smem:[#allocation0]]
  $region26: #{_forward_impl.3} parent=0
    _
  %s7 = ssub.s32 1, %s5
  %s8 = scalar_select 0, %s7, %s5
  // Predicated region
  $region2: #{_forward_impl.3} parent=0 // pred_check
    _
  $region3: #{_forward_impl.3} parent=0 // pred_check_branch
    %10 = sbr.rel (0) target = $region5
  $region4: #{_forward_impl.3} parent=0 // pred_region
    _
  $region5: #{_forward_impl.3} parent=0 // pred_fallthru
    _
  // Predicated region
  $region6: #{_forward_impl.3} parent=0 // pred_check
    _
  $region7: #{_forward_impl.3} parent=0 // pred_check_branch
    %12 = sbr.rel (0) target = $region9
  $region8: #{_forward_impl.3} parent=0 // pred_region
    _
  $region9: #{_forward_impl.3} parent=0 // pred_fallthru
    _
  // Predicated region
  $region10: #{_forward_impl.3} parent=0 // pred_check
    _
  $region11: #{_forward_impl.3} parent=0 // pred_check_branch
    %14 = sbr.rel (0) target = $region13
  $region12: #{_forward_impl.3} parent=0 // pred_region
    _
  $region13: #{_forward_impl.3} parent=0 // pred_fallthru
    _
  // Predicated region
  $region14: #{_forward_impl.3} parent=0 // pred_check
    _
  $region15: #{_forward_impl.3} parent=0 // pred_check_branch
    %16 = sbr.rel (0) target = $region17
  $region16: #{_forward_impl.3} parent=0 // pred_region
    _
  $region17: #{_forward_impl.3} parent=0 // pred_fallthru
    _
  %v18 = vld [vmem:[%s0] sm:$0xff]
  %v19 = vld [vmem:[%s0 + $0x8] sm:$0xff]
  %v20 = vld [vmem:[%s0 + $0x10] sm:$0xff]
  %v21 = vld [vmem:[%s0 + $0x18] sm:$0xff]
  %v22 = vld [vmem:[%s0 + $0x20] sm:$0xff]
  %v23 = vld [vmem:[%s0 + $0x28] sm:$0xff]
  %v24 = vpack.c.bf16 %v19, %v18
  %v25 = vpack.c.bf16 %v21, %v20
  %v26 = vpack.c.bf16 %v23, %v22
  %v27 = vld [vmem:[%s1] sm:$0xf]
  %v28 = vld [vmem:[%s1 + $0x4] sm:$0xf]
  %v29 = vld [vmem:[%s1 + $0x8] sm:$0xf]
  %v30 = vld [vmem:[%s1 + $0xc] sm:$0xf]
  %v31 = vld [vmem:[%s1 + $0x10] sm:$0xf]
  %v32 = vld [vmem:[%s1 + $0x14] sm:$0xf]
  %v33 = vld [vmem:[%s2] sm:$0x1]
  %v35 = vperm.slane %v33, 0
  %v43 = vunpack.c.l.b16 %v27
  %v44 = vunpack.c.l.b16 %v28
  %v45 = vunpack.c.l.b16 %v29
  %v46 = vunpack.c.l.b16 %v30
  %v47 = vunpack.c.l.b16 %v31
  %v48 = vunpack.c.l.b16 %v32
  %v49 = vpack.c.b16 %v44, %v43
  %v50 = vpack.c.b16 %v46, %v45
  %v51 = vpack.c.b16 %v48, %v47
  %vm55 = vcmask 392192
  %v57 = vsel %vm55, %v24, 0
  %v60 = vsel %vm55, %v25, 0
  %v63 = vsel %vm55, %v26, 0
  %65 = vmatpush.bf16.msra.mxu0 0
  %66 = vmatpush.bf16.msra.mxu0 0
  %67 = vmatpush.bf16.msra.mxu0 0
  %68 = vmatpush.bf16.msra.mxu0 0
  %69 = vmatpush.bf16.msra.mxu0 0
  %70 = vmatpush.bf16.msra.mxu0 %v51
  %71 = vmatpush.bf16.msra.mxu0 %v50
  %72 = vmatpush.bf16.msra.mxu0 %v49
  %73 = vmatmul.bf16.gmra.mxu0 %v57
  %v74 = vpop.f32.mrf.mxu0
  %v75 = vadd.f32 %v35, %v74
  %v76 = vpop.f32.mrf.mxu0
  %v77 = vadd.f32 %v35, %v76
  %78 = vmatmul.bf16.gmra.mxu0 %v60
  %v79 = vpop.f32.mrf.mxu0
  %v80 = vadd.f32 %v35, %v79
  %v81 = vpop.f32.mrf.mxu0
  %v82 = vadd.f32 %v35, %v81
  %83 = vmatmul.bf16.gmra.mxu0 %v63
  %v84 = vpop.f32.mrf.mxu0
  %v85 = vadd.f32 %v35, %v84
  %v86 = vpop.f32.mrf.mxu0
  %v87 = vadd.f32 %v35, %v86
  %88 = vdwg.mxu0
  %v89 = vpack.c.bf16 %v77, %v75
  %v90 = vpack.c.bf16 %v82, %v80
  %v91 = vpack.c.bf16 %v87, %v85
  %v92 = vld [vmem:[%s3] sm:$0xf]
  %v93 = vld [vmem:[%s3 + $0x4] sm:$0xf]
  %v94 = vld [vmem:[%s3 + $0x8] sm:$0xf]
  %v95 = vld [vmem:[%s3 + $0xc] sm:$0xf]
  %v100 = vunpack.c.l.b16 %v92
  %v101 = vunpack.c.l.b16 %v93
  %v102 = vunpack.c.l.b16 %v94
  %v103 = vunpack.c.l.b16 %v95
  %v104 = vpack.c.b16 %v101, %v100
  %v105 = vpack.c.b16 %v103, %v102
  %vm108 = vcmask 261120
  %v110 = vsel %vm108, %v89, 0
  %v113 = vsel %vm108, %v90, 0
  %v116 = vsel %vm108, %v91, 0
  %118 = vmatpush.bf16.msra.mxu0 0
  %119 = vmatpush.bf16.msra.mxu0 0
  %120 = vmatpush.bf16.msra.mxu0 0
  %121 = vmatpush.bf16.msra.mxu0 0
  %122 = vmatpush.bf16.msra.mxu0 0
  %123 = vmatpush.bf16.msra.mxu0 0
  %124 = vmatpush.bf16.msra.mxu0 %v105
  %125 = vmatpush.bf16.msra.mxu0 %v104
  %126 = vmatmul.bf16.gmra.mxu0 %v110
  %v127 = vpop.f32.mrf.mxu0
  %v128 = vadd.f32 0.0, %v127
  %v129 = vpop.f32.mrf.mxu0
  %v130 = vadd.f32 0.0, %v129
  %131 = vmatmul.bf16.gmra.mxu0 %v113
  %v132 = vpop.f32.mrf.mxu0
  %v133 = vadd.f32 0.0, %v132
  %v134 = vpop.f32.mrf.mxu0
  %v135 = vadd.f32 0.0, %v134
  %136 = vmatmul.bf16.gmra.mxu0 %v116
  %v137 = vpop.f32.mrf.mxu0
  %v138 = vadd.f32 0.0, %v137
  %v139 = vpop.f32.mrf.mxu0
  %v140 = vadd.f32 0.0, %v139
  %141 = vdwg.mxu0
  %v142 = vmax.f32 %v128, 0.0
  %v143 = vmax.f32 %v130, 0.0
  %v144 = vmax.f32 %v133, 0.0
  %v145 = vmax.f32 %v135, 0.0
  %v146 = vmax.f32 %v138, 0.0
  %v147 = vmax.f32 %v140, 0.0
  %148 = vst.msk [vmem:[%s4] sm:$0xff] %vm108, %v75
  %149 = vst.msk [vmem:[%s4 + $0x8] sm:$0xff] %vm108, %v77
  %150 = vst.msk [vmem:[%s4 + $0x10] sm:$0xff] %vm108, %v80
  %151 = vst.msk [vmem:[%s4 + $0x18] sm:$0xff] %vm108, %v82
  %152 = vst.msk [vmem:[%s4 + $0x20] sm:$0xff] %vm108, %v85
  %153 = vst.msk [vmem:[%s4 + $0x28] sm:$0xff] %vm108, %v87
  %160 = vrot.lane.b32.xlu0 %v142, 32
  %v161 = vpop.permute.xlu0 %160
  %162 = vrot.lane.b32.xlu0 %v143, 32
  %v163 = vpop.permute.xlu0 %162
  %164 = vrot.lane.b32.xlu0 %v144, 32
  %v165 = vpop.permute.xlu0 %164
  %166 = vrot.lane.b32.xlu0 %v145, 32
  %v167 = vpop.permute.xlu0 %166
  %168 = vrot.lane.b32.xlu0 %v146, 32
  %v169 = vpop.permute.xlu0 %168
  %170 = vrot.lane.b32.xlu0 %v147, 32
  %v171 = vpop.permute.xlu0 %170
  %vm178 = vcmask 785664
  %179 = vst.msk [vmem:[%s4] sm:$0xff] %vm178, %v161
  %180 = vst.msk [vmem:[%s4 + $0x8] sm:$0xff] %vm178, %v163
  %181 = vst.msk [vmem:[%s4 + $0x10] sm:$0xff] %vm178, %v165
  %182 = vst.msk [vmem:[%s4 + $0x18] sm:$0xff] %vm178, %v167
  %183 = vst.msk [vmem:[%s4 + $0x20] sm:$0xff] %vm178, %v169
  %184 = vst.msk [vmem:[%s4 + $0x28] sm:$0xff] %vm178, %v171
  // Predicated region
  $region18: #{_forward_impl.3} parent=0 // pred_check
    _
  $region19: #{_forward_impl.3} parent=0 // pred_check_branch
    %186 = sbr.rel (0) target = $region21
  $region20: #{_forward_impl.3} parent=0 // pred_region
    _
  $region21: #{_forward_impl.3} parent=0 // pred_fallthru
    _
  // Predicated region
  $region22: #{_forward_impl.3} parent=0 // pred_check
    _
  $region23: #{_forward_impl.3} parent=0 // pred_check_branch
    %188 = sbr.rel (0) target = $region25
  $region24: #{_forward_impl.3} parent=0 // pred_region
    _
  $region25: #{_forward_impl.3} parent=0 // pred_fallthru
    _

// kernel: _forward_impl.4
$region0: #{_forward_impl.4}
  #allocation0 [shape = 'u32[]', space=smem, size = 0x4, offset = 0x4, fixed_abs, tag = 'smem constant byte address 0x4 - core index']
  #allocation1 [shape = 'u32[72,128]{1,0:T(1,128)}', space=vmem, size = 0x9000, scoped, tag = 'internal scratch']
  %s0 = inlined_call_operand.vmem [shape: f32[2,16,32], index: 0, kind: input, shape index: {}]
  %s1 = inlined_call_operand.vmem [shape: f32[2,16,32], index: 1, kind: input, shape index: {}]
  %s2 = inlined_call_operand.vmem [shape: f32[16,32], index: 2, kind: input, shape index: {}]
  %s3 = inlined_call_operand.vmem [shape: f32[2,52,32], index: 3, kind: input, shape index: {}]
  %s4 = inlined_call_operand.vmem [shape: f32[2,2,32], index: 4, kind: input, shape index: {}]
  %s5 = inlined_call_operand.vmem [shape: bf16[32,32], index: 5, kind: input, shape index: {}]
  %s6 = inlined_call_operand.vmem [shape: bf16[32,64], index: 6, kind: input, shape index: {}]
  %s7 = inlined_call_operand.vmem [shape: bf16[32,32], index: 7, kind: input, shape index: {}]
  %s8 = inlined_call_operand.vmem [shape: bf16[32,32], index: 8, kind: input, shape index: {}]
  %s9 = inlined_call_operand.vmem [shape: f32[2,16,32], index: 9, kind: output, shape index: {0}]
  %s10 = inlined_call_operand.vmem [shape: f32[2,2,32], index: 10, kind: output, shape index: {1}]
  %11 = xla_tuple %s9, %s10
  %s12 = sld [smem:[#allocation0]]
  $region77: #{_forward_impl.4} parent=0
    _
  %s14 = ssub.s32 1, %s12
  %s15 = scalar_select 0, %s14, %s12
  loop: start=0, step=1, limit=4
  $region2: #{_forward_impl.4} parent=0 // loop_pre_header
    _
  $region3: #{_forward_impl.4} parent=0 // loop_header
    %s17 = sphi 0, %s21
    %p18 = scmp.ge.s32.totalorder %s17, 4
    %s27 = sphi 0, %s29
    %s30 = sphi 0, %s27
    %s31 = sphi 0, %s30
    %s47 = sphi 0, %s31
    %s53 = sphi 0, %s55
    %s56 = sphi 0, %s53
    %s57 = sphi 0, %s56
    %s73 = sphi 0, %s57
    %s77 = sphi 0, %s77
    %s79 = sphi 0, %s77
    %s80 = sphi 0, %s79
    %s94 = sphi 0, %s80
    %s100 = sphi 0, %s102
    %s103 = sphi 0, %s100
    %s104 = sphi 0, %s103
    %s120 = sphi 0, %s104
    %s126 = sphi 0, %s128
    %s129 = sphi 0, %s126
    %s130 = sphi 0, %s129
    %s146 = sphi 0, %s130
    %s150 = sphi 0, %s150
    %s152 = sphi 0, %s150
    %s153 = sphi 0, %s152
    %s167 = sphi 0, %s153
    %s171 = sphi 0, %s171
    %s173 = sphi 0, %s171
    %s174 = sphi 0, %s173
    %s188 = sphi 0, %s174
    %s192 = sphi 0, %s192
    %s194 = sphi 0, %s192
    %s195 = sphi 0, %s194
    %s209 = sphi 0, %s195
    %s213 = sphi 0, %s213
    %s215 = sphi 0, %s213
    %s216 = sphi 0, %s215
    %s230 = sphi 0, %s216
    %s236 = sphi 0, %s238
    %s239 = sphi 0, %s236
    %s240 = sphi 0, %s239
    %s256 = sphi 0, %s240
    %s262 = sphi 0, %s264
    %s265 = sphi 0, %s262
    %s266 = sphi 0, %s265
    %s282 = sphi 0, %s266
  $region4: #{_forward_impl.4} parent=0 // loop_header_branch
    %20 = sbr.rel (%p18) target = $region8
  $region5: #{_forward_impl.4} parent=0 // loop_body
    %s22 = ssub.s32 %s17, 1
    %s23 = ssub.s32 %s17, 2
    %s24 = sadd.s32 %s17, 1
    %s25 = ssub.s32 %s17, %s24
    %p26 = scmp.eq.s32.totalorder %s25, 0
    %s28 = sadd.s32 %s27, 1
    %s29 = scalar_select %p26, %s27, %s28
    %p32 = pneg %p26
    %p33 = scmp.eq.s32.totalorder %s17, 1
    %p34 = por %p32, %p33
    %p35 = scmp.ne.s32.totalorder %s27, %s30
    %p36 = scmp.eq.s32.totalorder %s17, 0
    %p37 = por %p35, %p36
    %p38 = scmp.ne.s32.totalorder %s27, %s30
    %p39 = scmp.eq.s32.totalorder %s22, 1
    %p40 = por %p38, %p39
    %p41 = scmp.ne.s32.totalorder %s30, %s31
    %p42 = scmp.eq.s32.totalorder %s22, 0
    %p43 = por %p41, %p42
    %p44 = scmp.ne.s32.totalorder %s30, %s31
    %p45 = scmp.eq.s32.totalorder %s23, 1
    %p46 = por %p44, %p45
    %p48 = scmp.ne.s32.totalorder %s31, %s47
    %p49 = scmp.eq.s32.totalorder %s23, 0
    %p50 = por %p48, %p49
    %s51 = ssub.s32 %s17, %s24
    %p52 = scmp.eq.s32.totalorder %s51, 0
    %s54 = sadd.s32 %s53, 1
    %s55 = scalar_select %p52, %s53, %s54
    %p58 = pneg %p52
    %p59 = scmp.eq.s32.totalorder %s17, 1
    %p60 = por %p58, %p59
    %p61 = scmp.ne.s32.totalorder %s53, %s56
    %p62 = scmp.eq.s32.totalorder %s17, 0
    %p63 = por %p61, %p62
    %p64 = scmp.ne.s32.totalorder %s53, %s56
    %p65 = scmp.eq.s32.totalorder %s22, 1
    %p66 = por %p64, %p65
    %p67 = scmp.ne.s32.totalorder %s56, %s57
    %p68 = scmp.eq.s32.totalorder %s22, 0
    %p69 = por %p67, %p68
    %p70 = scmp.ne.s32.totalorder %s56, %s57
    %p71 = scmp.eq.s32.totalorder %s23, 1
    %p72 = por %p70, %p71
    %p74 = scmp.ne.s32.totalorder %s57, %s73
    %p75 = scmp.eq.s32.totalorder %s23, 0
    %p76 = por %p74, %p75
    %s78 = sadd.s32 %s77, 1
    %p81 = scmp.eq.s32.totalorder %s17, 1
    %p82 = scmp.ne.s32.totalorder %s77, %s79
    %p83 = scmp.eq.s32.totalorder %s17, 0
    %p84 = por %p82, %p83
    %p85 = scmp.ne.s32.totalorder %s77, %s79
    %p86 = scmp.eq.s32.totalorder %s22, 1
    %p87 = por %p85, %p86
    %p88 = scmp.ne.s32.totalorder %s79, %s80
    %p89 = scmp.eq.s32.totalorder %s22, 0
    %p90 = por %p88, %p89
    %p91 = scmp.ne.s32.totalorder %s79, %s80
    %p92 = scmp.eq.s32.totalorder %s23, 1
    %p93 = por %p91, %p92
    %p95 = scmp.ne.s32.totalorder %s80, %s94
    %p96 = scmp.eq.s32.totalorder %s23, 0
    %p97 = por %p95, %p96
    %s98 = ssub.s32 %s17, %s24
    %p99 = scmp.eq.s32.totalorder %s98, 0
    %s101 = sadd.s32 %s100, 1
    %s102 = scalar_select %p99, %s100, %s101
    %p105 = pneg %p99
    %p106 = scmp.eq.s32.totalorder %s17, 1
    %p107 = por %p105, %p106
    %p108 = scmp.ne.s32.totalorder %s100, %s103
    %p109 = scmp.eq.s32.totalorder %s17, 0
    %p110 = por %p108, %p109
    %p111 = scmp.ne.s32.totalorder %s100, %s103
    %p112 = scmp.eq.s32.totalorder %s22, 1
    %p113 = por %p111, %p112
    %p114 = scmp.ne.s32.totalorder %s103, %s104
    %p115 = scmp.eq.s32.totalorder %s22, 0
    %p116 = por %p114, %p115
    %p117 = scmp.ne.s32.totalorder %s103, %s104
    %p118 = scmp.eq.s32.totalorder %s23, 1
    %p119 = por %p117, %p118
    %p121 = scmp.ne.s32.totalorder %s104, %s120
    %p122 = scmp.eq.s32.totalorder %s23, 0
    %p123 = por %p121, %p122
    %s124 = ssub.s32 %s17, %s24
    %p125 = scmp.eq.s32.totalorder %s124, 0
    %s127 = sadd.s32 %s126, 1
    %s128 = scalar_select %p125, %s126, %s127
    %p131 = pneg %p125
    %p132 = scmp.eq.s32.totalorder %s17, 1
    %p133 = por %p131, %p132
    %p134 = scmp.ne.s32.totalorder %s126, %s129
    %p135 = scmp.eq.s32.totalorder %s17, 0
    %p136 = por %p134, %p135
    %p137 = scmp.ne.s32.totalorder %s126, %s129
    %p138 = scmp.eq.s32.totalorder %s22, 1
    %p139 = por %p137, %p138
    %p140 = scmp.ne.s32.totalorder %s129, %s130
    %p141 = scmp.eq.s32.totalorder %s22, 0
    %p142 = por %p140, %p141
    %p143 = scmp.ne.s32.totalorder %s129, %s130
    %p144 = scmp.eq.s32.totalorder %s23, 1
    %p145 = por %p143, %p144
    %p147 = scmp.ne.s32.totalorder %s130, %s146
    %p148 = scmp.eq.s32.totalorder %s23, 0
    %p149 = por %p147, %p148
    %s151 = sadd.s32 %s150, 1
    %p154 = scmp.eq.s32.totalorder %s17, 1
    %p155 = scmp.ne.s32.totalorder %s150, %s152
    %p156 = scmp.eq.s32.totalorder %s17, 0
    %p157 = por %p155, %p156
    %p158 = scmp.ne.s32.totalorder %s150, %s152
    %p159 = scmp.eq.s32.totalorder %s22, 1
    %p160 = por %p158, %p159
    %p161 = scmp.ne.s32.totalorder %s152, %s153
    %p162 = scmp.eq.s32.totalorder %s22, 0
    %p163 = por %p161, %p162
    %p164 = scmp.ne.s32.totalorder %s152, %s153
    %p165 = scmp.eq.s32.totalorder %s23, 1
    %p166 = por %p164, %p165
    %p168 = scmp.ne.s32.totalorder %s153, %s167
    %p169 = scmp.eq.s32.totalorder %s23, 0
    %p170 = por %p168, %p169
    %s172 = sadd.s32 %s171, 1
    %p175 = scmp.eq.s32.totalorder %s17, 1
    %p176 = scmp.ne.s32.totalorder %s171, %s173
    %p177 = scmp.eq.s32.totalorder %s17, 0
    %p178 = por %p176, %p177
    %p179 = scmp.ne.s32.totalorder %s171, %s173
    %p180 = scmp.eq.s32.totalorder %s22, 1
    %p181 = por %p179, %p180
    %p182 = scmp.ne.s32.totalorder %s173, %s174
    %p183 = scmp.eq.s32.totalorder %s22, 0
    %p184 = por %p182, %p183
    %p185 = scmp.ne.s32.totalorder %s173, %s174
    %p186 = scmp.eq.s32.totalorder %s23, 1
    %p187 = por %p185, %p186
    %p189 = scmp.ne.s32.totalorder %s174, %s188
    %p190 = scmp.eq.s32.totalorder %s23, 0
    %p191 = por %p189, %p190
    %s193 = sadd.s32 %s192, 1
    %p196 = scmp.eq.s32.totalorder %s17, 1
    %p197 = scmp.ne.s32.totalorder %s192, %s194
    %p198 = scmp.eq.s32.totalorder %s17, 0
    %p199 = por %p197, %p198
    %p200 = scmp.ne.s32.totalorder %s192, %s194
    %p201 = scmp.eq.s32.totalorder %s22, 1
    %p202 = por %p200, %p201
    %p203 = scmp.ne.s32.totalorder %s194, %s195
    %p204 = scmp.eq.s32.totalorder %s22, 0
    %p205 = por %p203, %p204
    %p206 = scmp.ne.s32.totalorder %s194, %s195
    %p207 = scmp.eq.s32.totalorder %s23, 1
    %p208 = por %p206, %p207
    %p210 = scmp.ne.s32.totalorder %s195, %s209
    %p211 = scmp.eq.s32.totalorder %s23, 0
    %p212 = por %p210, %p211
    %s214 = sadd.s32 %s213, 1
    %p217 = scmp.eq.s32.totalorder %s17, 1
    %p218 = scmp.ne.s32.totalorder %s213, %s215
    %p219 = scmp.eq.s32.totalorder %s17, 0
    %p220 = por %p218, %p219
    %p221 = scmp.ne.s32.totalorder %s213, %s215
    %p222 = scmp.eq.s32.totalorder %s22, 1
    %p223 = por %p221, %p222
    %p224 = scmp.ne.s32.totalorder %s215, %s216
    %p225 = scmp.eq.s32.totalorder %s22, 0
    %p226 = por %p224, %p225
    %p227 = scmp.ne.s32.totalorder %s215, %s216
    %p228 = scmp.eq.s32.totalorder %s23, 1
    %p229 = por %p227, %p228
    %p231 = scmp.ne.s32.totalorder %s216, %s230
    %p232 = scmp.eq.s32.totalorder %s23, 0
    %p233 = por %p231, %p232
    %s234 = ssub.s32 %s17, %s24
    %p235 = scmp.eq.s32.totalorder %s234, 0
    %s237 = sadd.s32 %s236, 1
    %s238 = scalar_select %p235, %s236, %s237
    %p241 = pneg %p235
    %p242 = scmp.eq.s32.totalorder %s17, 1
    %p243 = por %p241, %p242
    %p244 = scmp.ne.s32.totalorder %s236, %s239
    %p245 = scmp.eq.s32.totalorder %s17, 0
    %p246 = por %p244, %p245
    %p247 = scmp.ne.s32.totalorder %s236, %s239
    %p248 = scmp.eq.s32.totalorder %s22, 1
    %p249 = por %p247, %p248
    %p250 = scmp.ne.s32.totalorder %s239, %s240
    %p251 = scmp.eq.s32.totalorder %s22, 0
    %p252 = por %p250, %p251
    %p253 = scmp.ne.s32.totalorder %s239, %s240
    %p254 = scmp.eq.s32.totalorder %s23, 1
    %p255 = por %p253, %p254
    %p257 = scmp.ne.s32.totalorder %s240, %s256
    %p258 = scmp.eq.s32.totalorder %s23, 0
    %p259 = por %p257, %p258
    %s260 = ssub.s32 %s17, %s24
    %p261 = scmp.eq.s32.totalorder %s260, 0
    %s263 = sadd.s32 %s262, 1
    %s264 = scalar_select %p261, %s262, %s263
    %p267 = pneg %p261
    %p268 = scmp.eq.s32.totalorder %s17, 1
    %p269 = por %p267, %p268
    %p270 = scmp.ne.s32.totalorder %s262, %s265
    %p271 = scmp.eq.s32.totalorder %s17, 0
    %p272 = por %p270, %p271
    %p273 = scmp.ne.s32.totalorder %s262, %s265
    %p274 = scmp.eq.s32.totalorder %s22, 1
    %p275 = por %p273, %p274
    %p276 = scmp.ne.s32.totalorder %s265, %s266
    %p277 = scmp.eq.s32.totalorder %s22, 0
    %p278 = por %p276, %p277
    %p279 = scmp.ne.s32.totalorder %s265, %s266
    %p280 = scmp.eq.s32.totalorder %s23, 1
    %p281 = por %p279, %p280
    %p283 = scmp.ne.s32.totalorder %s266, %s282
    %p284 = scmp.eq.s32.totalorder %s23, 0
    %p285 = por %p283, %p284
    %p286 = scmp.le.s32.totalorder 1, %s17
    %p287 = scmp.lt.s32.totalorder %s17, 3
    %p288 = pnand %p286, %p287
    %p289 = pneg %p288
    // Predicated region
    $region9: #{_forward_impl.4} parent=5 // pred_check
      _
    $region10: #{_forward_impl.4} parent=5 // pred_check_branch
      %291 = sbr.rel (%p288) target = $region12
    $region11: #{_forward_impl.4} parent=5 // pred_region
      %s292 = ssub.s32 %s17, 1
      // Predicated region
      $region13: #{_forward_impl.4} parent=11 // pred_check
        %p293 = pneg %p90
      $region14: #{_forward_impl.4} parent=11 // pred_check_branch
        %295 = sbr.rel (%p293) target = $region16
      $region15: #{_forward_impl.4} parent=11 // pred_region
        _
      $region16: #{_forward_impl.4} parent=11 // pred_fallthru
        _
      // Predicated region
      $region17: #{_forward_impl.4} parent=11 // pred_check
        %p296 = pneg %p163
      $region18: #{_forward_impl.4} parent=11 // pred_check_branch
        %298 = sbr.rel (%p296) target = $region20
      $region19: #{_forward_impl.4} parent=11 // pred_region
        _
      $region20: #{_forward_impl.4} parent=11 // pred_fallthru
        _
      // Predicated region
      $region21: #{_forward_impl.4} parent=11 // pred_check
        %p299 = pneg %p184
      $region22: #{_forward_impl.4} parent=11 // pred_check_branch
        %301 = sbr.rel (%p299) target = $region24
      $region23: #{_forward_impl.4} parent=11 // pred_region
        _
      $region24: #{_forward_impl.4} parent=11 // pred_fallthru
        _
      // Predicated region
      $region25: #{_forward_impl.4} parent=11 // pred_check
        %p302 = pneg %p205
      $region26: #{_forward_impl.4} parent=11 // pred_check_branch
        %304 = sbr.rel (%p302) target = $region28
      $region27: #{_forward_impl.4} parent=11 // pred_region
        _
      $region28: #{_forward_impl.4} parent=11 // pred_fallthru
        _
      // Predicated region
      $region29: #{_forward_impl.4} parent=11 // pred_check
        %p305 = pneg %p226
      $region30: #{_forward_impl.4} parent=11 // pred_check_branch
        %307 = sbr.rel (%p305) target = $region32
      $region31: #{_forward_impl.4} parent=11 // pred_region
        _
      $region32: #{_forward_impl.4} parent=11 // pred_fallthru
        _
    $region12: #{_forward_impl.4} parent=5 // pred_fallthru
      _
    %p308 = scmp.lt.s32.totalorder %s17, 2
    // Predicated region
    $region33: #{_forward_impl.4} parent=5 // pred_check
      %p309 = pneg %p308
    $region34: #{_forward_impl.4} parent=5 // pred_check_branch
      %311 = sbr.rel (%p309) target = $region36
    $region35: #{_forward_impl.4} parent=5 // pred_region
      // Predicated region
      $region37: #{_forward_impl.4} parent=35 // pred_check
        %p312 = pneg %p37
      $region38: #{_forward_impl.4} parent=35 // pred_check_branch
        %314 = sbr.rel (%p312) target = $region40
      $region39: #{_forward_impl.4} parent=35 // pred_region
        %p315 = scmp.lt.s32.totalorder %s17, 1
        %s316 = scalar_select %p315, %s17, 1
        %s317 = smul.addr %s316, 2
        %s318 = smul.addr %s317, 8
        %s319 = scalar_lea.vmem %s0, %s318
      $region40: #{_forward_impl.4} parent=35 // pred_fallthru
        _
      // Predicated region
      $region41: #{_forward_impl.4} parent=35 // pred_check
        %p320 = pneg %p63
      $region42: #{_forward_impl.4} parent=35 // pred_check_branch
        %322 = sbr.rel (%p320) target = $region44
      $region43: #{_forward_impl.4} parent=35 // pred_region
        %p323 = scmp.lt.s32.totalorder %s17, 1
        %s324 = scalar_select %p323, %s17, 1
        %s325 = smul.addr %s324, 2
        %s326 = smul.addr %s325, 8
        %s327 = scalar_lea.vmem %s1, %s326
      $region44: #{_forward_impl.4} parent=35 // pred_fallthru
        _
      // Predicated region
      $region45: #{_forward_impl.4} parent=35 // pred_check
        %p328 = pneg %p110
      $region46: #{_forward_impl.4} parent=35 // pred_check_branch
        %330 = sbr.rel (%p328) target = $region48
      $region47: #{_forward_impl.4} parent=35 // pred_region
        %p331 = scmp.lt.s32.totalorder %s17, 1
        %s332 = scalar_select %p331, %s17, 1
        %s333 = smul.addr %s332, 7
        %s334 = smul.addr %s333, 8
        %s335 = scalar_lea.vmem %s3, %s334
      $region48: #{_forward_impl.4} parent=35 // pred_fallthru
        _
      // Predicated region
      $region49: #{_forward_impl.4} parent=35 // pred_check
        %p336 = pneg %p136
      $region50: #{_forward_impl.4} parent=35 // pred_check_branch
        %338 = sbr.rel (%p336) target = $region52
      $region51: #{_forward_impl.4} parent=35 // pred_region
        %p339 = scmp.lt.s32.totalorder %s17, 1
        %s340 = scalar_select %p339, %s17, 1
        %s341 = smul.addr %s340, 2
        %s342 = scalar_lea.vmem %s4, %s341
      $region52: #{_forward_impl.4} parent=35 // pred_fallthru
        _
    $region36: #{_forward_impl.4} parent=5 // pred_fallthru
      _
    %p343 = scmp.le.s32.totalorder 1, %s17
    %p344 = scmp.lt.s32.totalorder %s17, 3
    %p345 = pnand %p343, %p344
    %p346 = pneg %p345
    // Predicated region
    $region53: #{_forward_impl.4} parent=5 // pred_check
      _
    $region54: #{_forward_impl.4} parent=5 // pred_check_branch
      %348 = sbr.rel (%p345) target = $region56
    $region55: #{_forward_impl.4} parent=5 // pred_region
      %s349 = ssub.s32 %s17, 1
      %p350 = scmp.lt.s32.totalorder %s22, 1
      %s351 = scalar_select %p350, %s22, 1
      %s352 = smul.addr %s351, 2
      %s353 = smul.addr %s352, 8
      %s354 = scalar_lea.vmem %s0, %s353
      %p355 = pneg %p43
      %p356 = pneg %p40
      %p357 = scmp.lt.s32.totalorder %s22, 1
      %s358 = scalar_select %p357, %s22, 1
      %s359 = smul.addr %s358, 2
      %s360 = smul.addr %s359, 8
      %s361 = scalar_lea.vmem %s1, %s360
      %p362 = pneg %p69
      %p363 = pneg %p66
      %p364 = pneg %p90
      %p365 = pneg %p87
      %p366 = scmp.lt.s32.totalorder %s22, 1
      %s367 = scalar_select %p366, %s22, 1
      %s368 = smul.addr %s367, 7
      %s369 = smul.addr %s368, 8
      %s370 = scalar_lea.vmem %s3, %s369
      %p371 = pneg %p116
      %p372 = pneg %p113
      %p373 = scmp.lt.s32.totalorder %s22, 1
      %s374 = scalar_select %p373, %s22, 1
      %s375 = smul.addr %s374, 2
      %s376 = scalar_lea.vmem %s4, %s375
      %p377 = pneg %p142
      %p378 = pneg %p139
      %p379 = pneg %p163
      %p380 = pneg %p160
      %p381 = pneg %p184
      %p382 = pneg %p181
      %p383 = pneg %p205
      %p384 = pneg %p202
      %p385 = pneg %p226
      %p386 = pneg %p223
      %p387 = pneg %p252
      %p388 = pneg %p249
      %p389 = scmp.lt.s32.totalorder %s22, 1
      %s390 = scalar_select %p389, %s22, 1
      %s391 = smul.addr %s390, 2
      %s392 = smul.addr %s391, 8
      %s393 = scalar_lea.vmem %s9, %s392
      %p394 = pneg %p278
      %p395 = pneg %p275
      %p396 = scmp.lt.s32.totalorder %s22, 1
      %s397 = scalar_select %p396, %s22, 1
      %s398 = smul.addr %s397, 2
      %s399 = scalar_lea.vmem %s10, %s398
      %p400 = scmp.lt.s32.totalorder %s22, 1
      %s401 = scalar_select %p400, %s22, 1
      %s402 = smul.addr %s401, 2
      %s403 = smul.addr %s402, 8
      %s404 = scalar_lea.vmem %s0, %s403
      %p405 = scmp.lt.s32.totalorder %s22, 1
      %s406 = scalar_select %p405, %s22, 1
      %s407 = smul.addr %s406, 2
      %s408 = smul.addr %s407, 8
      %s409 = scalar_lea.vmem %s1, %s408
      %p410 = scmp.lt.s32.totalorder %s22, 1
      %s411 = scalar_select %p410, %s22, 1
      %s412 = smul.addr %s411, 7
      %s413 = smul.addr %s412, 8
      %s414 = scalar_lea.vmem %s3, %s413
      %p415 = scmp.lt.s32.totalorder %s22, 1
      %s416 = scalar_select %p415, %s22, 1
      %s417 = smul.addr %s416, 2
      %s418 = scalar_lea.vmem %s4, %s417
      %p419 = scmp.lt.s32.totalorder %s22, 1
      %s420 = scalar_select %p419, %s22, 1
      %s421 = smul.addr %s420, 2
      %s422 = smul.addr %s421, 8
      %s423 = scalar_lea.vmem %s9, %s422
      %p424 = scmp.lt.s32.totalorder %s22, 1
      %s425 = scalar_select %p424, %s22, 1
      %s426 = smul.addr %s425, 2
      %s427 = scalar_lea.vmem %s10, %s426
      %v429 = vld [vmem:[%s404] sm:$0xff]
      %v430 = vld [vmem:[%s404 + $0x8] sm:$0xff]
      %v431 = vld [vmem:[%s2] sm:$0xff]
      %v432 = vld [vmem:[%s2 + $0x8] sm:$0xff]
      %v433 = vadd.f32 %v429, %v431
      %v434 = vadd.f32 %v430, %v432
      %v435 = vld [vmem:[%s409] sm:$0xff]
      %v436 = vld [vmem:[%s409 + $0x8] sm:$0xff]
      %v437 = vadd.f32 %v433, %v435
      %v438 = vadd.f32 %v434, %v436
      %v439 = vpack.c.bf16 %v438, %v437
      %v440 = vld [vmem:[%s414] sm:$0xff]
      %v441 = vld [vmem:[%s414 + $0x8] sm:$0xff]
      %v442 = vld [vmem:[%s414 + $0x10] sm:$0xff]
      %v443 = vld [vmem:[%s414 + $0x18] sm:$0xff]
      %v444 = vld [vmem:[%s414 + $0x20] sm:$0xff]
      %v445 = vld [vmem:[%s414 + $0x28] sm:$0xff]
      %v446 = vld [vmem:[%s414 + $0x30] sm:$0xf]
      %v447 = vpack.c.bf16 %v441, %v440
      %v448 = vpack.c.bf16 %v443, %v442
      %v449 = vpack.c.bf16 %v445, %v444
      %v450 = vpack.c.bf16 %v446, %v446
      %v451 = vld [vmem:[%s5] sm:$0xf]
      %v452 = vld [vmem:[%s5 + $0x4] sm:$0xf]
      %v453 = vld [vmem:[%s5 + $0x8] sm:$0xf]
      %v454 = vld [vmem:[%s5 + $0xc] sm:$0xf]
      %v459 = vunpack.c.l.b16 %v451
      %v460 = vunpack.c.l.b16 %v452
      %v461 = vunpack.c.l.b16 %v453
      %v462 = vunpack.c.l.b16 %v454
      %v463 = vpack.c.b16 %v460, %v459
      %v464 = vpack.c.b16 %v462, %v461
      %vm467 = vcmask 261120
      %v469 = vsel %vm467, %v439, 0
      %471 = vmatpush.bf16.msra.mxu0 0
      %472 = vmatpush.bf16.msra.mxu0 0
      %473 = vmatpush.bf16.msra.mxu0 0
      %474 = vmatpush.bf16.msra.mxu0 0
      %475 = vmatpush.bf16.msra.mxu0 0
      %476 = vmatpush.bf16.msra.mxu0 0
      %477 = vmatpush.bf16.msra.mxu0 %v464
      %478 = vmatpush.bf16.msra.mxu0 %v463
      %479 = vmatmul.bf16.gmra.mxu0 %v469
      %v480 = vpop.f32.mrf.mxu0
      %v481 = vadd.f32 0.0, %v480
      %v482 = vpop.f32.mrf.mxu0
      %v483 = vadd.f32 0.0, %v482
      %484 = vdwg.mxu0
      %v485 = vld [vmem:[%s6] sm:$0xf]
      %v486 = vld [vmem:[%s6 + $0x4] sm:$0xf]
      %v487 = vld [vmem:[%s6 + $0x8] sm:$0xf]
      %v488 = vld [vmem:[%s6 + $0xc] sm:$0xf]
      %v493 = vunpack.c.l.b16 %v485
      %v494 = vunpack.c.l.b16 %v486
      %v495 = vunpack.c.l.b16 %v487
      %v496 = vunpack.c.l.b16 %v488
      %v497 = vpack.c.b16 %v494, %v493
      %v498 = vpack.c.b16 %v496, %v495
      %v502 = vsel %vm467, %v447, 0
      %v505 = vsel %vm467, %v448, 0
      %v508 = vsel %vm467, %v449, 0
      %v511 = vsel %vm467, %v450, 0
      %513 = vmatpush.bf16.msra.mxu0 0
      %514 = vmatpush.bf16.msra.mxu0 0
      %515 = vmatpush.bf16.msra.mxu0 0
      %516 = vmatpush.bf16.msra.mxu0 0
      %517 = vmatpush.bf16.msra.mxu0 0
      %518 = vmatpush.bf16.msra.mxu0 0
      %519 = vmatpush.bf16.msra.mxu0 %v498
      %520 = vmatpush.bf16.msra.mxu0 %v497
      %521 = vmatmul.bf16.gmra.mxu0 %v502
      %v522 = vpop.f32.mrf.mxu0
      %v523 = vadd.f32 0.0, %v522
      %v524 = vpop.f32.mrf.mxu0
      %v525 = vadd.f32 0.0, %v524
      %526 = vmatmul.bf16.gmra.mxu0 %v505
      %v527 = vpop.f32.mrf.mxu0
      %v528 = vadd.f32 0.0, %v527
      %v529 = vpop.f32.mrf.mxu0
      %v530 = vadd.f32 0.0, %v529
      %531 = vmatmul.bf16.gmra.mxu0 %v508
      %v532 = vpop.f32.mrf.mxu0
      %v533 = vadd.f32 0.0, %v532
      %v534 = vpop.f32.mrf.mxu0
      %v535 = vadd.f32 0.0, %v534
      %536 = vmatmul.bf16.gmra.mxu0 %v511
      %v537 = vpop.f32.mrf.mxu0
      %v538 = vadd.f32 0.0, %v537
      %v539 = vpop.f32.mrf.mxu0
      %540 = vdwg.mxu0
      %v541 = vpack.c.bf16 %v483, %v481
      %v542 = vpack.c.bf16 %v525, %v523
      %v543 = vpack.c.bf16 %v530, %v528
      %v544 = vpack.c.bf16 %v535, %v533
      %v545 = vpack.c.bf16 %v538, %v538
      %v547 = vsel %vm467, %v541, 0
      %v550 = vsel %vm467, %v542, 0
      %v553 = vsel %vm467, %v543, 0
      %v556 = vsel %vm467, %v544, 0
      %v559 = vsel %vm467, %v545, 0
      %561 = vmatpush.bf16.xpose.msra.mxu0 0
      %562 = vmatpush.bf16.xpose.msra.mxu0 0
      %563 = vmatpush.bf16.xpose.msra.mxu0 0
      %564 = vmatpush.bf16.xpose.msra.mxu0 0
      %565 = vmatpush.bf16.xpose.msra.mxu0 %v559
      %566 = vmatpush.bf16.xpose.msra.mxu0 %v556
      %567 = vmatpush.bf16.xpose.msra.mxu0 %v553
      %568 = vmatpush.bf16.xpose.msra.mxu0 %v550
      %569 = vmatmul.bf16.gmra.mxu0 %v547
      %v570 = vpop.f32.mrf.mxu0
      %v571 = vadd.f32 0.0, %v570
      %v572 = vpop.f32.mrf.mxu0
      %v573 = vadd.f32 0.0, %v572
      %574 = vdwg.mxu0
      %v575 = vmul.f32 %v571, 0.17677669
      %v576 = vmul.f32 %v573, 0.17677669
      %vm577 = vcmask 424960
      %v578 = vsel %vm577, %v575, -inf
      %579 = vmax.xlane.f32.xlu0 %v578
      %v580 = vpop.xlane.xlu0 %579
      %v581 = vsel %vm577, %v576, -inf
      %582 = vmax.xlane.f32.xlu0 %v581
      %v583 = vpop.xlane.xlu0 %582
      %v584 = vsub.f32 %v575, %v580
      %v585 = vsub.f32 %v576, %v583
      %v586 = vmul.f32 %v584, 1.442695
      %v587 = vpow.pop %v586
      %v588 = vmul.f32 %v585, 1.442695
      %v589 = vpow.pop %v588
      %v590 = vsel %vm577, %v587, 0.0
      %591 = vadd.xlane.f32.xlu0 %v590
      %v592 = vpop.xlane.xlu0 %591
      %v593 = vsel %vm577, %v589, 0.0
      %594 = vadd.xlane.f32.xlu0 %v593
      %v595 = vpop.xlane.xlu0 %594
      %v596 = vrcp.pop %v592
      %v597 = vrcp.pop %v595
      %v598 = vmul.f32 %v587, %v596
      %v599 = vmul.f32 %v589, %v597
      %v600 = vpack.c.bf16 %v599, %v598
      %605 = vrot.lane.b32.xlu0 %v542, 96
      %v606 = vpop.permute.xlu0 %605
      %607 = vrot.lane.b32.xlu0 %v543, 96
      %v608 = vpop.permute.xlu0 %607
      %609 = vrot.lane.b32.xlu0 %v544, 96
      %v610 = vpop.permute.xlu0 %609
      %611 = vrot.lane.b32.xlu0 %v545, 96
      %v612 = vpop.permute.xlu0 %611
      %v617 = vsel %vm577, %v600, 0
      %vm619 = vcmask 1041408
      %v621 = vsel %vm619, %v612, 0
      %623 = vmatpush.bf16.msra.mxu0 0
      %624 = vmatpush.bf16.msra.mxu0 0
      %625 = vmatpush.bf16.msra.mxu0 0
      %626 = vmatpush.bf16.msra.mxu0 0
      %627 = vmatpush.bf16.msra.mxu0 %v621
      %628 = vmatpush.bf16.msra.mxu0 %v610
      %629 = vmatpush.bf16.msra.mxu0 %v608
      %630 = vmatpush.bf16.msra.mxu0 %v606
      %631 = vmatmul.bf16.gmra.mxu0 %v617
      %v632 = vpop.f32.mrf.mxu0
      %v633 = vadd.f32 0.0, %v632
      %v634 = vpop.f32.mrf.mxu0
      %v635 = vadd.f32 0.0, %v634
      %636 = vdwg.mxu0
      %v637 = vpack.c.bf16 %v635, %v633
      %v638 = vld [vmem:[%s7] sm:$0xf]
      %v639 = vld [vmem:[%s7 + $0x4] sm:$0xf]
      %v640 = vld [vmem:[%s7 + $0x8] sm:$0xf]
      %v641 = vld [vmem:[%s7 + $0xc] sm:$0xf]
      %v646 = vunpack.c.l.b16 %v638
      %v647 = vunpack.c.l.b16 %v639
      %v648 = vunpack.c.l.b16 %v640
      %v649 = vunpack.c.l.b16 %v641
      %v650 = vpack.c.b16 %v647, %v646
      %v651 = vpack.c.b16 %v649, %v648
      %v655 = vsel %vm467, %v637, 0
      %657 = vmatpush.bf16.msra.mxu0 0
      %658 = vmatpush.bf16.msra.mxu0 0
      %659 = vmatpush.bf16.msra.mxu0 0
      %660 = vmatpush.bf16.msra.mxu0 0
      %661 = vmatpush.bf16.msra.mxu0 0
      %662 = vmatpush.bf16.msra.mxu0 0
      %663 = vmatpush.bf16.msra.mxu0 %v651
      %664 = vmatpush.bf16.msra.mxu0 %v650
      %665 = vmatmul.bf16.gmra.mxu0 %v655
      %v666 = vpop.f32.mrf.mxu0
      %v667 = vadd.f32 0.0, %v666
      %v668 = vpop.f32.mrf.mxu0
      %v669 = vadd.f32 0.0, %v668
      %670 = vdwg.mxu0
      %v671 = vadd.f32 %v429, %v667
      %v672 = vadd.f32 %v430, %v669
      %673 = vst.msk [vmem:[%s423] sm:$0xff] %vm467, %v671
      %674 = vst.msk [vmem:[%s423 + $0x8] sm:$0xff] %vm467, %v672
      %v675 = vld [vmem:[%s418] sm:$0x3]
      %v676 = vpack.c.bf16 %v675, %v675
      %v677 = vld [vmem:[%s8] sm:$0xf]
      %v678 = vld [vmem:[%s8 + $0x4] sm:$0xf]
      %v679 = vld [vmem:[%s8 + $0x8] sm:$0xf]
      %v680 = vld [vmem:[%s8 + $0xc] sm:$0xf]
      %v685 = vunpack.c.l.b16 %v677
      %v686 = vunpack.c.l.b16 %v678
      %v687 = vunpack.c.l.b16 %v679
      %v688 = vunpack.c.l.b16 %v680
      %v689 = vpack.c.b16 %v686, %v685
      %v690 = vpack.c.b16 %v688, %v687
      %v694 = vsel %vm467, %v676, 0
      %696 = vmatpush.bf16.msra.mxu0 0
      %697 = vmatpush.bf16.msra.mxu0 0
      %698 = vmatpush.bf16.msra.mxu0 0
      %699 = vmatpush.bf16.msra.mxu0 0
      %700 = vmatpush.bf16.msra.mxu0 0
      %701 = vmatpush.bf16.msra.mxu0 0
      %702 = vmatpush.bf16.msra.mxu0 %v690
      %703 = vmatpush.bf16.msra.mxu0 %v689
      %704 = vmatmul.bf16.gmra.mxu0 %v694
      %v705 = vpop.f32.mrf.mxu0
      %v706 = vadd.f32 0.0, %v705
      %v707 = vpop.f32.mrf.mxu0
      %708 = vdwg.mxu0
      %v709 = vadd.f32 %v675, %v706
      %vm710 = vcmask 254976
      %711 = vst.msk [vmem:[%s427] sm:$0x3] %vm710, %v709
      %p712 = scmp.lt.s32.totalorder %s22, 1
      %s713 = scalar_select %p712, %s22, 1
      %s714 = smul.addr %s713, 2
      %s715 = smul.addr %s714, 8
      %s716 = scalar_lea.vmem %s9, %s715
      %p717 = scmp.lt.s32.totalorder %s22, 1
      %s718 = scalar_select %p717, %s22, 1
      %s719 = smul.addr %s718, 2
      %s720 = scalar_lea.vmem %s10, %s719
      // Predicated region
      $region57: #{_forward_impl.4} parent=55 // pred_check
        %p721 = pneg %p249
      $region58: #{_forward_impl.4} parent=55 // pred_check_branch
        %723 = sbr.rel (%p721) target = $region60
      $region59: #{_forward_impl.4} parent=55 // pred_region
        _
      $region60: #{_forward_impl.4} parent=55 // pred_fallthru
        _
      // Predicated region
      $region61: #{_forward_impl.4} parent=55 // pred_check
        %p724 = pneg %p275
      $region62: #{_forward_impl.4} parent=55 // pred_check_branch
        %726 = sbr.rel (%p724) target = $region64
      $region63: #{_forward_impl.4} parent=55 // pred_region
        _
      $region64: #{_forward_impl.4} parent=55 // pred_fallthru
        _
    $region56: #{_forward_impl.4} parent=5 // pred_fallthru
      _
    %p727 = scmp.le.s32.totalorder 2, %s17
    // Predicated region
    $region65: #{_forward_impl.4} parent=5 // pred_check
      %p728 = pneg %p727
    $region66: #{_forward_impl.4} parent=5 // pred_check_branch
      %730 = sbr.rel (%p728) target = $region68
    $region67: #{_forward_impl.4} parent=5 // pred_region
      %s731 = ssub.s32 %s17, 2
      // Predicated region
      $region69: #{_forward_impl.4} parent=67 // pred_check
        %p732 = pneg %p255
      $region70: #{_forward_impl.4} parent=67 // pred_check_branch
        %734 = sbr.rel (%p732) target = $region72
      $region71: #{_forward_impl.4} parent=67 // pred_region
        %p735 = scmp.lt.s32.totalorder %s23, 1
        %s736 = scalar_select %p735, %s23, 1
        %s737 = smul.addr %s736, 2
        %s738 = smul.addr %s737, 8
        %s739 = scalar_lea.vmem %s9, %s738
      $region72: #{_forward_impl.4} parent=67 // pred_fallthru
        _
      // Predicated region
      $region73: #{_forward_impl.4} parent=67 // pred_check
        %p740 = pneg %p281
      $region74: #{_forward_impl.4} parent=67 // pred_check_branch
        %742 = sbr.rel (%p740) target = $region76
      $region75: #{_forward_impl.4} parent=67 // pred_region
        %p743 = scmp.lt.s32.totalorder %s23, 1
        %s744 = scalar_select %p743, %s23, 1
        %s745 = smul.addr %s744, 2
        %s746 = scalar_lea.vmem %s10, %s745
      $region76: #{_forward_impl.4} parent=67 // pred_fallthru
        _
    $region68: #{_forward_impl.4} parent=5 // pred_fallthru
      _
  $region6: #{_forward_impl.4} parent=0 // loop_footer
    %s21 = sadd.s32 1, %s17
  $region7: #{_forward_impl.4} parent=0 // loop_footer_branch
    %16 = sbr.rel target = $region3
  $region8: #{_forward_impl.4} parent=0 // loop_exit
    _

// kernel: _forward_impl.5
$region0: #{_forward_impl.5}
  #allocation0 [shape = 'u32[]', space=smem, size = 0x4, offset = 0x4, fixed_abs, tag = 'smem constant byte address 0x4 - core index']
  #allocation1 [shape = 'u32[72,128]{1,0:T(1,128)}', space=vmem, size = 0x9000, scoped, tag = 'internal scratch']
  %s0 = inlined_call_operand.vmem [shape: f32[2,16,32], index: 0, kind: input, shape index: {}]
  %s1 = inlined_call_operand.vmem [shape: f32[16,32], index: 1, kind: input, shape index: {}]
  %s2 = inlined_call_operand.vmem [shape: f32[1,32], index: 2, kind: input, shape index: {}]
  %s3 = inlined_call_operand.vmem [shape: f32[2,2,32], index: 3, kind: input, shape index: {}]
  %s4 = inlined_call_operand.vmem [shape: bf16[32,32], index: 4, kind: input, shape index: {}]
  %s5 = inlined_call_operand.vmem [shape: bf16[32,32], index: 5, kind: input, shape index: {}]
  %s6 = inlined_call_operand.vmem [shape: bf16[32,32], index: 6, kind: input, shape index: {}]
  %s7 = inlined_call_operand.vmem [shape: bf16[32,32], index: 7, kind: input, shape index: {}]
  %s8 = inlined_call_operand.vmem [shape: bf16[32,1], index: 8, kind: input, shape index: {}]
  %s9 = inlined_call_operand.vmem [shape: f32[16,64], index: 9, kind: input, shape index: {}]
  %s10 = inlined_call_operand.vmem [shape: f32[64,256], index: 10, kind: input, shape index: {}]
  %s11 = inlined_call_operand.vmem [shape: f32[2,1,64], index: 11, kind: output, shape index: {0}]
  %s12 = inlined_call_operand.vmem [shape: f32[2,1,256], index: 12, kind: output, shape index: {1}]
  %s13 = inlined_call_operand.vmem [shape: f32[2,1,1], index: 13, kind: output, shape index: {2}]
  %14 = xla_tuple %s11, %s12, %s13
  %s15 = sld [smem:[#allocation0]]
  $region93: #{_forward_impl.5} parent=0
    _
  %s17 = ssub.s32 1, %s15
  %s18 = scalar_select 0, %s17, %s15
  loop: start=0, step=1, limit=4
  $region2: #{_forward_impl.5} parent=0 // loop_pre_header
    _
  $region3: #{_forward_impl.5} parent=0 // loop_header
    %s20 = sphi 0, %s24
    %p21 = scmp.ge.s32.totalorder %s20, 4
    %s30 = sphi 0, %s32
    %s33 = sphi 0, %s30
    %s34 = sphi 0, %s33
    %s50 = sphi 0, %s34
    %s54 = sphi 0, %s54
    %s56 = sphi 0, %s54
    %s57 = sphi 0, %s56
    %s71 = sphi 0, %s57
    %s75 = sphi 0, %s75
    %s77 = sphi 0, %s75
    %s78 = sphi 0, %s77
    %s92 = sphi 0, %s78
    %s98 = sphi 0, %s100
    %s101 = sphi 0, %s98
    %s102 = sphi 0, %s101
    %s118 = sphi 0, %s102
    %s122 = sphi 0, %s122
    %s124 = sphi 0, %s122
    %s125 = sphi 0, %s124
    %s139 = sphi 0, %s125
    %s143 = sphi 0, %s143
    %s145 = sphi 0, %s143
    %s146 = sphi 0, %s145
    %s160 = sphi 0, %s146
    %s164 = sphi 0, %s164
    %s166 = sphi 0, %s164
    %s167 = sphi 0, %s166
    %s181 = sphi 0, %s167
    %s185 = sphi 0, %s185
    %s187 = sphi 0, %s185
    %s188 = sphi 0, %s187
    %s202 = sphi 0, %s188
    %s206 = sphi 0, %s206
    %s208 = sphi 0, %s206
    %s209 = sphi 0, %s208
    %s223 = sphi 0, %s209
    %s227 = sphi 0, %s227
    %s229 = sphi 0, %s227
    %s230 = sphi 0, %s229
    %s244 = sphi 0, %s230
    %s248 = sphi 0, %s248
    %s250 = sphi 0, %s248
    %s251 = sphi 0, %s250
    %s265 = sphi 0, %s251
    %s271 = sphi 0, %s273
    %s274 = sphi 0, %s271
    %s275 = sphi 0, %s274
    %s291 = sphi 0, %s275
    %s297 = sphi 0, %s299
    %s300 = sphi 0, %s297
    %s301 = sphi 0, %s300
    %s317 = sphi 0, %s301
    %s323 = sphi 0, %s325
    %s326 = sphi 0, %s323
    %s327 = sphi 0, %s326
    %s343 = sphi 0, %s327
  $region4: #{_forward_impl.5} parent=0 // loop_header_branch
    %23 = sbr.rel (%p21) target = $region8
  $region5: #{_forward_impl.5} parent=0 // loop_body
    %s25 = ssub.s32 %s20, 1
    %s26 = ssub.s32 %s20, 2
    %s27 = sadd.s32 %s20, 1
    %s28 = ssub.s32 %s20, %s27
    %p29 = scmp.eq.s32.totalorder %s28, 0
    %s31 = sadd.s32 %s30, 1
    %s32 = scalar_select %p29, %s30, %s31
    %p35 = pneg %p29
    %p36 = scmp.eq.s32.totalorder %s20, 1
    %p37 = por %p35, %p36
    %p38 = scmp.ne.s32.totalorder %s30, %s33
    %p39 = scmp.eq.s32.totalorder %s20, 0
    %p40 = por %p38, %p39
    %p41 = scmp.ne.s32.totalorder %s30, %s33
    %p42 = scmp.eq.s32.totalorder %s25, 1
    %p43 = por %p41, %p42
    %p44 = scmp.ne.s32.totalorder %s33, %s34
    %p45 = scmp.eq.s32.totalorder %s25, 0
    %p46 = por %p44, %p45
    %p47 = scmp.ne.s32.totalorder %s33, %s34
    %p48 = scmp.eq.s32.totalorder %s26, 1
    %p49 = por %p47, %p48
    %p51 = scmp.ne.s32.totalorder %s34, %s50
    %p52 = scmp.eq.s32.totalorder %s26, 0
    %p53 = por %p51, %p52
    %s55 = sadd.s32 %s54, 1
    %p58 = scmp.eq.s32.totalorder %s20, 1
    %p59 = scmp.ne.s32.totalorder %s54, %s56
    %p60 = scmp.eq.s32.totalorder %s20, 0
    %p61 = por %p59, %p60
    %p62 = scmp.ne.s32.totalorder %s54, %s56
    %p63 = scmp.eq.s32.totalorder %s25, 1
    %p64 = por %p62, %p63
    %p65 = scmp.ne.s32.totalorder %s56, %s57
    %p66 = scmp.eq.s32.totalorder %s25, 0
    %p67 = por %p65, %p66
    %p68 = scmp.ne.s32.totalorder %s56, %s57
    %p69 = scmp.eq.s32.totalorder %s26, 1
    %p70 = por %p68, %p69
    %p72 = scmp.ne.s32.totalorder %s57, %s71
    %p73 = scmp.eq.s32.totalorder %s26, 0
    %p74 = por %p72, %p73
    %s76 = sadd.s32 %s75, 1
    %p79 = scmp.eq.s32.totalorder %s20, 1
    %p80 = scmp.ne.s32.totalorder %s75, %s77
    %p81 = scmp.eq.s32.totalorder %s20, 0
    %p82 = por %p80, %p81
    %p83 = scmp.ne.s32.totalorder %s75, %s77
    %p84 = scmp.eq.s32.totalorder %s25, 1
    %p85 = por %p83, %p84
    %p86 = scmp.ne.s32.totalorder %s77, %s78
    %p87 = scmp.eq.s32.totalorder %s25, 0
    %p88 = por %p86, %p87
    %p89 = scmp.ne.s32.totalorder %s77, %s78
    %p90 = scmp.eq.s32.totalorder %s26, 1
    %p91 = por %p89, %p90
    %p93 = scmp.ne.s32.totalorder %s78, %s92
    %p94 = scmp.eq.s32.totalorder %s26, 0
    %p95 = por %p93, %p94
    %s96 = ssub.s32 %s20, %s27
    %p97 = scmp.eq.s32.totalorder %s96, 0
    %s99 = sadd.s32 %s98, 1
    %s100 = scalar_select %p97, %s98, %s99
    %p103 = pneg %p97
    %p104 = scmp.eq.s32.totalorder %s20, 1
    %p105 = por %p103, %p104
    %p106 = scmp.ne.s32.totalorder %s98, %s101
    %p107 = scmp.eq.s32.totalorder %s20, 0
    %p108 = por %p106, %p107
    %p109 = scmp.ne.s32.totalorder %s98, %s101
    %p110 = scmp.eq.s32.totalorder %s25, 1
    %p111 = por %p109, %p110
    %p112 = scmp.ne.s32.totalorder %s101, %s102
    %p113 = scmp.eq.s32.totalorder %s25, 0
    %p114 = por %p112, %p113
    %p115 = scmp.ne.s32.totalorder %s101, %s102
    %p116 = scmp.eq.s32.totalorder %s26, 1
    %p117 = por %p115, %p116
    %p119 = scmp.ne.s32.totalorder %s102, %s118
    %p120 = scmp.eq.s32.totalorder %s26, 0
    %p121 = por %p119, %p120
    %s123 = sadd.s32 %s122, 1
    %p126 = scmp.eq.s32.totalorder %s20, 1
    %p127 = scmp.ne.s32.totalorder %s122, %s124
    %p128 = scmp.eq.s32.totalorder %s20, 0
    %p129 = por %p127, %p128
    %p130 = scmp.ne.s32.totalorder %s122, %s124
    %p131 = scmp.eq.s32.totalorder %s25, 1
    %p132 = por %p130, %p131
    %p133 = scmp.ne.s32.totalorder %s124, %s125
    %p134 = scmp.eq.s32.totalorder %s25, 0
    %p135 = por %p133, %p134
    %p136 = scmp.ne.s32.totalorder %s124, %s125
    %p137 = scmp.eq.s32.totalorder %s26, 1
    %p138 = por %p136, %p137
    %p140 = scmp.ne.s32.totalorder %s125, %s139
    %p141 = scmp.eq.s32.totalorder %s26, 0
    %p142 = por %p140, %p141
    %s144 = sadd.s32 %s143, 1
    %p147 = scmp.eq.s32.totalorder %s20, 1
    %p148 = scmp.ne.s32.totalorder %s143, %s145
    %p149 = scmp.eq.s32.totalorder %s20, 0
    %p150 = por %p148, %p149
    %p151 = scmp.ne.s32.totalorder %s143, %s145
    %p152 = scmp.eq.s32.totalorder %s25, 1
    %p153 = por %p151, %p152
    %p154 = scmp.ne.s32.totalorder %s145, %s146
    %p155 = scmp.eq.s32.totalorder %s25, 0
    %p156 = por %p154, %p155
    %p157 = scmp.ne.s32.totalorder %s145, %s146
    %p158 = scmp.eq.s32.totalorder %s26, 1
    %p159 = por %p157, %p158
    %p161 = scmp.ne.s32.totalorder %s146, %s160
    %p162 = scmp.eq.s32.totalorder %s26, 0
    %p163 = por %p161, %p162
    %s165 = sadd.s32 %s164, 1
    %p168 = scmp.eq.s32.totalorder %s20, 1
    %p169 = scmp.ne.s32.totalorder %s164, %s166
    %p170 = scmp.eq.s32.totalorder %s20, 0
    %p171 = por %p169, %p170
    %p172 = scmp.ne.s32.totalorder %s164, %s166
    %p173 = scmp.eq.s32.totalorder %s25, 1
    %p174 = por %p172, %p173
    %p175 = scmp.ne.s32.totalorder %s166, %s167
    %p176 = scmp.eq.s32.totalorder %s25, 0
    %p177 = por %p175, %p176
    %p178 = scmp.ne.s32.totalorder %s166, %s167
    %p179 = scmp.eq.s32.totalorder %s26, 1
    %p180 = por %p178, %p179
    %p182 = scmp.ne.s32.totalorder %s167, %s181
    %p183 = scmp.eq.s32.totalorder %s26, 0
    %p184 = por %p182, %p183
    %s186 = sadd.s32 %s185, 1
    %p189 = scmp.eq.s32.totalorder %s20, 1
    %p190 = scmp.ne.s32.totalorder %s185, %s187
    %p191 = scmp.eq.s32.totalorder %s20, 0
    %p192 = por %p190, %p191
    %p193 = scmp.ne.s32.totalorder %s185, %s187
    %p194 = scmp.eq.s32.totalorder %s25, 1
    %p195 = por %p193, %p194
    %p196 = scmp.ne.s32.totalorder %s187, %s188
    %p197 = scmp.eq.s32.totalorder %s25, 0
    %p198 = por %p196, %p197
    %p199 = scmp.ne.s32.totalorder %s187, %s188
    %p200 = scmp.eq.s32.totalorder %s26, 1
    %p201 = por %p199, %p200
    %p203 = scmp.ne.s32.totalorder %s188, %s202
    %p204 = scmp.eq.s32.totalorder %s26, 0
    %p205 = por %p203, %p204
    %s207 = sadd.s32 %s206, 1
    %p210 = scmp.eq.s32.totalorder %s20, 1
    %p211 = scmp.ne.s32.totalorder %s206, %s208
    %p212 = scmp.eq.s32.totalorder %s20, 0
    %p213 = por %p211, %p212
    %p214 = scmp.ne.s32.totalorder %s206, %s208
    %p215 = scmp.eq.s32.totalorder %s25, 1
    %p216 = por %p214, %p215
    %p217 = scmp.ne.s32.totalorder %s208, %s209
    %p218 = scmp.eq.s32.totalorder %s25, 0
    %p219 = por %p217, %p218
    %p220 = scmp.ne.s32.totalorder %s208, %s209
    %p221 = scmp.eq.s32.totalorder %s26, 1
    %p222 = por %p220, %p221
    %p224 = scmp.ne.s32.totalorder %s209, %s223
    %p225 = scmp.eq.s32.totalorder %s26, 0
    %p226 = por %p224, %p225
    %s228 = sadd.s32 %s227, 1
    %p231 = scmp.eq.s32.totalorder %s20, 1
    %p232 = scmp.ne.s32.totalorder %s227, %s229
    %p233 = scmp.eq.s32.totalorder %s20, 0
    %p234 = por %p232, %p233
    %p235 = scmp.ne.s32.totalorder %s227, %s229
    %p236 = scmp.eq.s32.totalorder %s25, 1
    %p237 = por %p235, %p236
    %p238 = scmp.ne.s32.totalorder %s229, %s230
    %p239 = scmp.eq.s32.totalorder %s25, 0
    %p240 = por %p238, %p239
    %p241 = scmp.ne.s32.totalorder %s229, %s230
    %p242 = scmp.eq.s32.totalorder %s26, 1
    %p243 = por %p241, %p242
    %p245 = scmp.ne.s32.totalorder %s230, %s244
    %p246 = scmp.eq.s32.totalorder %s26, 0
    %p247 = por %p245, %p246
    %s249 = sadd.s32 %s248, 1
    %p252 = scmp.eq.s32.totalorder %s20, 1
    %p253 = scmp.ne.s32.totalorder %s248, %s250
    %p254 = scmp.eq.s32.totalorder %s20, 0
    %p255 = por %p253, %p254
    %p256 = scmp.ne.s32.totalorder %s248, %s250
    %p257 = scmp.eq.s32.totalorder %s25, 1
    %p258 = por %p256, %p257
    %p259 = scmp.ne.s32.totalorder %s250, %s251
    %p260 = scmp.eq.s32.totalorder %s25, 0
    %p261 = por %p259, %p260
    %p262 = scmp.ne.s32.totalorder %s250, %s251
    %p263 = scmp.eq.s32.totalorder %s26, 1
    %p264 = por %p262, %p263
    %p266 = scmp.ne.s32.totalorder %s251, %s265
    %p267 = scmp.eq.s32.totalorder %s26, 0
    %p268 = por %p266, %p267
    %s269 = ssub.s32 %s20, %s27
    %p270 = scmp.eq.s32.totalorder %s269, 0
    %s272 = sadd.s32 %s271, 1
    %s273 = scalar_select %p270, %s271, %s272
    %p276 = pneg %p270
    %p277 = scmp.eq.s32.totalorder %s20, 1
    %p278 = por %p276, %p277
    %p279 = scmp.ne.s32.totalorder %s271, %s274
    %p280 = scmp.eq.s32.totalorder %s20, 0
    %p281 = por %p279, %p280
    %p282 = scmp.ne.s32.totalorder %s271, %s274
    %p283 = scmp.eq.s32.totalorder %s25, 1
    %p284 = por %p282, %p283
    %p285 = scmp.ne.s32.totalorder %s274, %s275
    %p286 = scmp.eq.s32.totalorder %s25, 0
    %p287 = por %p285, %p286
    %p288 = scmp.ne.s32.totalorder %s274, %s275
    %p289 = scmp.eq.s32.totalorder %s26, 1
    %p290 = por %p288, %p289
    %p292 = scmp.ne.s32.totalorder %s275, %s291
    %p293 = scmp.eq.s32.totalorder %s26, 0
    %p294 = por %p292, %p293
    %s295 = ssub.s32 %s20, %s27
    %p296 = scmp.eq.s32.totalorder %s295, 0
    %s298 = sadd.s32 %s297, 1
    %s299 = scalar_select %p296, %s297, %s298
    %p302 = pneg %p296
    %p303 = scmp.eq.s32.totalorder %s20, 1
    %p304 = por %p302, %p303
    %p305 = scmp.ne.s32.totalorder %s297, %s300
    %p306 = scmp.eq.s32.totalorder %s20, 0
    %p307 = por %p305, %p306
    %p308 = scmp.ne.s32.totalorder %s297, %s300
    %p309 = scmp.eq.s32.totalorder %s25, 1
    %p310 = por %p308, %p309
    %p311 = scmp.ne.s32.totalorder %s300, %s301
    %p312 = scmp.eq.s32.totalorder %s25, 0
    %p313 = por %p311, %p312
    %p314 = scmp.ne.s32.totalorder %s300, %s301
    %p315 = scmp.eq.s32.totalorder %s26, 1
    %p316 = por %p314, %p315
    %p318 = scmp.ne.s32.totalorder %s301, %s317
    %p319 = scmp.eq.s32.totalorder %s26, 0
    %p320 = por %p318, %p319
    %s321 = ssub.s32 %s20, %s27
    %p322 = scmp.eq.s32.totalorder %s321, 0
    %s324 = sadd.s32 %s323, 1
    %s325 = scalar_select %p322, %s323, %s324
    %p328 = pneg %p322
    %p329 = scmp.eq.s32.totalorder %s20, 1
    %p330 = por %p328, %p329
    %p331 = scmp.ne.s32.totalorder %s323, %s326
    %p332 = scmp.eq.s32.totalorder %s20, 0
    %p333 = por %p331, %p332
    %p334 = scmp.ne.s32.totalorder %s323, %s326
    %p335 = scmp.eq.s32.totalorder %s25, 1
    %p336 = por %p334, %p335
    %p337 = scmp.ne.s32.totalorder %s326, %s327
    %p338 = scmp.eq.s32.totalorder %s25, 0
    %p339 = por %p337, %p338
    %p340 = scmp.ne.s32.totalorder %s326, %s327
    %p341 = scmp.eq.s32.totalorder %s26, 1
    %p342 = por %p340, %p341
    %p344 = scmp.ne.s32.totalorder %s327, %s343
    %p345 = scmp.eq.s32.totalorder %s26, 0
    %p346 = por %p344, %p345
    %p347 = scmp.le.s32.totalorder 1, %s20
    %p348 = scmp.lt.s32.totalorder %s20, 3
    %p349 = pnand %p347, %p348
    %p350 = pneg %p349
    // Predicated region
    $region9: #{_forward_impl.5} parent=5 // pred_check
      _
    $region10: #{_forward_impl.5} parent=5 // pred_check_branch
      %352 = sbr.rel (%p349) target = $region12
    $region11: #{_forward_impl.5} parent=5 // pred_region
      %s353 = ssub.s32 %s20, 1
      // Predicated region
      $region13: #{_forward_impl.5} parent=11 // pred_check
        %p354 = pneg %p67
      $region14: #{_forward_impl.5} parent=11 // pred_check_branch
        %356 = sbr.rel (%p354) target = $region16
      $region15: #{_forward_impl.5} parent=11 // pred_region
        _
      $region16: #{_forward_impl.5} parent=11 // pred_fallthru
        _
      // Predicated region
      $region17: #{_forward_impl.5} parent=11 // pred_check
        %p357 = pneg %p88
      $region18: #{_forward_impl.5} parent=11 // pred_check_branch
        %359 = sbr.rel (%p357) target = $region20
      $region19: #{_forward_impl.5} parent=11 // pred_region
        _
      $region20: #{_forward_impl.5} parent=11 // pred_fallthru
        _
      // Predicated region
      $region21: #{_forward_impl.5} parent=11 // pred_check
        %p360 = pneg %p135
      $region22: #{_forward_impl.5} parent=11 // pred_check_branch
        %362 = sbr.rel (%p360) target = $region24
      $region23: #{_forward_impl.5} parent=11 // pred_region
        _
      $region24: #{_forward_impl.5} parent=11 // pred_fallthru
        _
      // Predicated region
      $region25: #{_forward_impl.5} parent=11 // pred_check
        %p363 = pneg %p156
      $region26: #{_forward_impl.5} parent=11 // pred_check_branch
        %365 = sbr.rel (%p363) target = $region28
      $region27: #{_forward_impl.5} parent=11 // pred_region
        _
      $region28: #{_forward_impl.5} parent=11 // pred_fallthru
        _
      // Predicated region
      $region29: #{_forward_impl.5} parent=11 // pred_check
        %p366 = pneg %p177
      $region30: #{_forward_impl.5} parent=11 // pred_check_branch
        %368 = sbr.rel (%p366) target = $region32
      $region31: #{_forward_impl.5} parent=11 // pred_region
        _
      $region32: #{_forward_impl.5} parent=11 // pred_fallthru
        _
      // Predicated region
      $region33: #{_forward_impl.5} parent=11 // pred_check
        %p369 = pneg %p198
      $region34: #{_forward_impl.5} parent=11 // pred_check_branch
        %371 = sbr.rel (%p369) target = $region36
      $region35: #{_forward_impl.5} parent=11 // pred_region
        _
      $region36: #{_forward_impl.5} parent=11 // pred_fallthru
        _
      // Predicated region
      $region37: #{_forward_impl.5} parent=11 // pred_check
        %p372 = pneg %p219
      $region38: #{_forward_impl.5} parent=11 // pred_check_branch
        %374 = sbr.rel (%p372) target = $region40
      $region39: #{_forward_impl.5} parent=11 // pred_region
        _
      $region40: #{_forward_impl.5} parent=11 // pred_fallthru
        _
      // Predicated region
      $region41: #{_forward_impl.5} parent=11 // pred_check
        %p375 = pneg %p240
      $region42: #{_forward_impl.5} parent=11 // pred_check_branch
        %377 = sbr.rel (%p375) target = $region44
      $region43: #{_forward_impl.5} parent=11 // pred_region
        _
      $region44: #{_forward_impl.5} parent=11 // pred_fallthru
        _
      // Predicated region
      $region45: #{_forward_impl.5} parent=11 // pred_check
        %p378 = pneg %p261
      $region46: #{_forward_impl.5} parent=11 // pred_check_branch
        %380 = sbr.rel (%p378) target = $region48
      $region47: #{_forward_impl.5} parent=11 // pred_region
        _
      $region48: #{_forward_impl.5} parent=11 // pred_fallthru
        _
    $region12: #{_forward_impl.5} parent=5 // pred_fallthru
      _
    %p381 = scmp.lt.s32.totalorder %s20, 2
    // Predicated region
    $region49: #{_forward_impl.5} parent=5 // pred_check
      %p382 = pneg %p381
    $region50: #{_forward_impl.5} parent=5 // pred_check_branch
      %384 = sbr.rel (%p382) target = $region52
    $region51: #{_forward_impl.5} parent=5 // pred_region
      // Predicated region
      $region53: #{_forward_impl.5} parent=51 // pred_check
        %p385 = pneg %p40
      $region54: #{_forward_impl.5} parent=51 // pred_check_branch
        %387 = sbr.rel (%p385) target = $region56
      $region55: #{_forward_impl.5} parent=51 // pred_region
        %p388 = scmp.lt.s32.totalorder %s20, 1
        %s389 = scalar_select %p388, %s20, 1
        %s390 = smul.addr %s389, 2
        %s391 = smul.addr %s390, 8
        %s392 = scalar_lea.vmem %s0, %s391
      $region56: #{_forward_impl.5} parent=51 // pred_fallthru
        _
      // Predicated region
      $region57: #{_forward_impl.5} parent=51 // pred_check
        %p393 = pneg %p108
      $region58: #{_forward_impl.5} parent=51 // pred_check_branch
        %395 = sbr.rel (%p393) target = $region60
      $region59: #{_forward_impl.5} parent=51 // pred_region
        %p396 = scmp.lt.s32.totalorder %s20, 1
        %s397 = scalar_select %p396, %s20, 1
        %s398 = smul.addr %s397, 2
        %s399 = scalar_lea.vmem %s3, %s398
      $region60: #{_forward_impl.5} parent=51 // pred_fallthru
        _
    $region52: #{_forward_impl.5} parent=5 // pred_fallthru
      _
    %p400 = scmp.le.s32.totalorder 1, %s20
    %p401 = scmp.lt.s32.totalorder %s20, 3
    %p402 = pnand %p400, %p401
    %p403 = pneg %p402
    // Predicated region
    $region61: #{_forward_impl.5} parent=5 // pred_check
      _
    $region62: #{_forward_impl.5} parent=5 // pred_check_branch
      %405 = sbr.rel (%p402) target = $region64
    $region63: #{_forward_impl.5} parent=5 // pred_region
      %s406 = ssub.s32 %s20, 1
      %p407 = scmp.lt.s32.totalorder %s25, 1
      %s408 = scalar_select %p407, %s25, 1
      %s409 = smul.addr %s408, 2
      %s410 = smul.addr %s409, 8
      %s411 = scalar_lea.vmem %s0, %s410
      %p412 = pneg %p46
      %p413 = pneg %p43
      %p414 = pneg %p67
      %p415 = pneg %p64
      %p416 = pneg %p88
      %p417 = pneg %p85
      %p418 = scmp.lt.s32.totalorder %s25, 1
      %s419 = scalar_select %p418, %s25, 1
      %s420 = smul.addr %s419, 2
      %s421 = scalar_lea.vmem %s3, %s420
      %p422 = pneg %p114
      %p423 = pneg %p111
      %p424 = pneg %p135
      %p425 = pneg %p132
      %p426 = pneg %p156
      %p427 = pneg %p153
      %p428 = pneg %p177
      %p429 = pneg %p174
      %p430 = pneg %p198
      %p431 = pneg %p195
      %p432 = pneg %p219
      %p433 = pneg %p216
      %p434 = pneg %p240
      %p435 = pneg %p237
      %p436 = pneg %p261
      %p437 = pneg %p258
      %p438 = pneg %p287
      %p439 = pneg %p284
      %p440 = scmp.lt.s32.totalorder %s25, 1
      %s441 = scalar_select %p440, %s25, 1
      %s442 = scalar_lea.vmem %s11, %s441
      %p443 = pneg %p313
      %p444 = pneg %p310
      %p445 = scmp.lt.s32.totalorder %s25, 1
      %s446 = scalar_select %p445, %s25, 1
      %s447 = smul.addr %s446, 2
      %s448 = scalar_lea.vmem %s12, %s447
      %p449 = pneg %p339
      %p450 = pneg %p336
      %p451 = scmp.lt.s32.totalorder %s25, 1
      %s452 = scalar_select %p451, %s25, 1
      %s453 = scalar_lea.vmem %s13, %s452
      %p454 = scmp.lt.s32.totalorder %s25, 1
      %s455 = scalar_select %p454, %s25, 1
      %s456 = smul.addr %s455, 2
      %s457 = smul.addr %s456, 8
      %s458 = scalar_lea.vmem %s0, %s457
      %p459 = scmp.lt.s32.totalorder %s25, 1
      %s460 = scalar_select %p459, %s25, 1
      %s461 = smul.addr %s460, 2
      %s462 = scalar_lea.vmem %s3, %s461
      %p463 = scmp.lt.s32.totalorder %s25, 1
      %s464 = scalar_select %p463, %s25, 1
      %s465 = scalar_lea.vmem %s11, %s464
      %p466 = scmp.lt.s32.totalorder %s25, 1
      %s467 = scalar_select %p466, %s25, 1
      %s468 = smul.addr %s467, 2
      %s469 = scalar_lea.vmem %s12, %s468
      %p470 = scmp.lt.s32.totalorder %s25, 1
      %s471 = scalar_select %p470, %s25, 1
      %s472 = scalar_lea.vmem %s13, %s471
      %v474 = vld [vmem:[%s458] sm:$0xff]
      %v475 = vld [vmem:[%s458 + $0x8] sm:$0xff]
      %v476 = vld [vmem:[%s2] sm:$0x1]
      %v478 = vperm.slane %v476, 0
      %v480 = vadd.f32 %v474, %v478
      %v481 = vadd.f32 %v475, %v478
      %v482 = vpack.c.bf16 %v481, %v480
      %v483 = vld [vmem:[%s1] sm:$0xff]
      %v484 = vld [vmem:[%s1 + $0x8] sm:$0xff]
      %v485 = vadd.f32 %v480, %v483
      %v486 = vadd.f32 %v481, %v484
      %v487 = vpack.c.bf16 %v486, %v485
      %v488 = vld [vmem:[%s462] sm:$0x3]
      %v489 = vpack.c.bf16 %v488, %v488
      %v490 = vld [vmem:[%s4] sm:$0xf]
      %v491 = vld [vmem:[%s4 + $0x4] sm:$0xf]
      %v492 = vld [vmem:[%s4 + $0x8] sm:$0xf]
      %v493 = vld [vmem:[%s4 + $0xc] sm:$0xf]
      %v498 = vunpack.c.l.b16 %v490
      %v499 = vunpack.c.l.b16 %v491
      %v500 = vunpack.c.l.b16 %v492
      %v501 = vunpack.c.l.b16 %v493
      %v502 = vpack.c.b16 %v499, %v498
      %v503 = vpack.c.b16 %v501, %v500
      %vm506 = vcmask 261120
      %v508 = vsel %vm506, %v489, 0
      %510 = vmatpush.bf16.msra.mxu0 0
      %511 = vmatpush.bf16.msra.mxu0 0
      %512 = vmatpush.bf16.msra.mxu0 0
      %513 = vmatpush.bf16.msra.mxu0 0
      %514 = vmatpush.bf16.msra.mxu0 0
      %515 = vmatpush.bf16.msra.mxu0 0
      %516 = vmatpush.bf16.msra.mxu0 %v503
      %517 = vmatpush.bf16.msra.mxu0 %v502
      %518 = vmatmul.bf16.gmra.mxu0 %v508
      %v519 = vpop.f32.mrf.mxu0
      %v520 = vadd.f32 0.0, %v519
      %v521 = vpop.f32.mrf.mxu0
      %522 = vdwg.mxu0
      %v523 = vld [vmem:[%s5] sm:$0xf]
      %v524 = vld [vmem:[%s5 + $0x4] sm:$0xf]
      %v525 = vld [vmem:[%s5 + $0x8] sm:$0xf]
      %v526 = vld [vmem:[%s5 + $0xc] sm:$0xf]
      %v531 = vunpack.c.l.b16 %v523
      %v532 = vunpack.c.l.b16 %v524
      %v533 = vunpack.c.l.b16 %v525
      %v534 = vunpack.c.l.b16 %v526
      %v535 = vpack.c.b16 %v532, %v531
      %v536 = vpack.c.b16 %v534, %v533
      %v540 = vsel %vm506, %v487, 0
      %542 = vmatpush.bf16.msra.mxu0 0
      %543 = vmatpush.bf16.msra.mxu0 0
      %544 = vmatpush.bf16.msra.mxu0 0
      %545 = vmatpush.bf16.msra.mxu0 0
      %546 = vmatpush.bf16.msra.mxu0 0
      %547 = vmatpush.bf16.msra.mxu0 0
      %548 = vmatpush.bf16.msra.mxu0 %v536
      %549 = vmatpush.bf16.msra.mxu0 %v535
      %550 = vmatmul.bf16.gmra.mxu0 %v540
      %v551 = vpop.f32.mrf.mxu0
      %v552 = vadd.f32 0.0, %v551
      %v553 = vpop.f32.mrf.mxu0
      %v554 = vadd.f32 0.0, %v553
      %555 = vdwg.mxu0
      %v556 = vld [vmem:[%s6] sm:$0xf]
      %v557 = vld [vmem:[%s6 + $0x4] sm:$0xf]
      %v558 = vld [vmem:[%s6 + $0x8] sm:$0xf]
      %v559 = vld [vmem:[%s6 + $0xc] sm:$0xf]
      %v564 = vunpack.c.l.b16 %v556
      %v565 = vunpack.c.l.b16 %v557
      %v566 = vunpack.c.l.b16 %v558
      %v567 = vunpack.c.l.b16 %v559
      %v568 = vpack.c.b16 %v565, %v564
      %v569 = vpack.c.b16 %v567, %v566
      %v573 = vsel %vm506, %v482, 0
      %575 = vmatpush.bf16.msra.mxu0 0
      %576 = vmatpush.bf16.msra.mxu0 0
      %577 = vmatpush.bf16.msra.mxu0 0
      %578 = vmatpush.bf16.msra.mxu0 0
      %579 = vmatpush.bf16.msra.mxu0 0
      %580 = vmatpush.bf16.msra.mxu0 0
      %581 = vmatpush.bf16.msra.mxu0 %v569
      %582 = vmatpush.bf16.msra.mxu0 %v568
      %583 = vmatmul.bf16.gmra.mxu0 %v573
      %v584 = vpop.f32.mrf.mxu0
      %v585 = vadd.f32 0.0, %v584
      %v586 = vpop.f32.mrf.mxu0
      %v587 = vadd.f32 0.0, %v586
      %588 = vdwg.mxu0
      %v589 = vpack.c.bf16 %v520, %v520
      %v590 = vpack.c.bf16 %v554, %v552
      %v592 = vsel %vm506, %v589, 0
      %v595 = vsel %vm506, %v590, 0
      %597 = vmatpush.bf16.xpose.msra.mxu0 0
      %598 = vmatpush.bf16.xpose.msra.mxu0 0
      %599 = vmatpush.bf16.xpose.msra.mxu0 0
      %600 = vmatpush.bf16.xpose.msra.mxu0 0
      %601 = vmatpush.bf16.xpose.msra.mxu0 0
      %602 = vmatpush.bf16.xpose.msra.mxu0 0
      %603 = vmatpush.bf16.xpose.msra.mxu0 0
      %604 = vmatpush.bf16.xpose.msra.mxu0 %v595
      %605 = vmatmul.bf16.gmra.mxu0 %v592
      %v606 = vpop.f32.mrf.mxu0
      %v607 = vadd.f32 0.0, %v606
      %v608 = vpop.f32.mrf.mxu0
      %609 = vdwg.mxu0
      %v610 = vmul.f32 %v607, 0.17677669
      %vm611 = vcmask 123904
      %v612 = vsel %vm611, %v610, -inf
      %613 = vmax.xlane.f32.xlu0 %v612
      %v614 = vpop.xlane.xlu0 %613
      %v615 = vsub.f32 %v610, %v614
      %v616 = vmul.f32 %v615, 1.442695
      %v617 = vpow.pop %v616
      %v618 = vsel %vm611, %v617, 0.0
      %619 = vadd.xlane.f32.xlu0 %v618
      %v620 = vpop.xlane.xlu0 %619
      %v621 = vrcp.pop %v620
      %v622 = vmul.f32 %v617, %v621
      %v623 = vpack.c.bf16 %v622, %v622
      %v624 = vpack.c.bf16 %v587, %v585
      %vm625 = vcmask 130048
      %v627 = vsel %vm625, %v623, 0
      %629 = vmatpush.bf16.msra.mxu0 0
      %630 = vmatpush.bf16.msra.mxu0 0
      %631 = vmatpush.bf16.msra.mxu0 0
      %632 = vmatpush.bf16.msra.mxu0 0
      %633 = vmatpush.bf16.msra.mxu0 0
      %634 = vmatpush.bf16.msra.mxu0 0
      %635 = vmatpush.bf16.msra.mxu0 0
      %636 = vmatpush.bf16.msra.mxu0 %v624
      %637 = vmatmul.bf16.gmra.mxu0 %v627
      %v638 = vpop.f32.mrf.mxu0
      %v639 = vadd.f32 0.0, %v638
      %v640 = vpop.f32.mrf.mxu0
      %641 = vdwg.mxu0
      %v642 = vpack.c.bf16 %v639, %v639
      %v643 = vld [vmem:[%s7] sm:$0xf]
      %v644 = vld [vmem:[%s7 + $0x4] sm:$0xf]
      %v645 = vld [vmem:[%s7 + $0x8] sm:$0xf]
      %v646 = vld [vmem:[%s7 + $0xc] sm:$0xf]
      %v651 = vunpack.c.l.b16 %v643
      %v652 = vunpack.c.l.b16 %v644
      %v653 = vunpack.c.l.b16 %v645
      %v654 = vunpack.c.l.b16 %v646
      %v655 = vpack.c.b16 %v652, %v651
      %v656 = vpack.c.b16 %v654, %v653
      %v660 = vsel %vm506, %v642, 0
      %662 = vmatpush.bf16.msra.mxu0 0
      %663 = vmatpush.bf16.msra.mxu0 0
      %664 = vmatpush.bf16.msra.mxu0 0
      %665 = vmatpush.bf16.msra.mxu0 0
      %666 = vmatpush.bf16.msra.mxu0 0
      %667 = vmatpush.bf16.msra.mxu0 0
      %668 = vmatpush.bf16.msra.mxu0 %v656
      %669 = vmatpush.bf16.msra.mxu0 %v655
      %670 = vmatmul.bf16.gmra.mxu0 %v660
      %v671 = vpop.f32.mrf.mxu0
      %v672 = vadd.f32 0.0, %v671
      %v673 = vpop.f32.mrf.mxu0
      %674 = vdwg.mxu0
      %v675 = vld [vmem:[%s8] sm:$0xf]
      %v676 = vld [vmem:[%s8 + $0x4] sm:$0xf]
      %v677 = vld [vmem:[%s8 + $0x8] sm:$0xf]
      %v678 = vld [vmem:[%s8 + $0xc] sm:$0xf]
      %v683 = vunpack.c.l.b16 %v675
      %v684 = vunpack.c.l.b16 %v676
      %v685 = vunpack.c.l.b16 %v677
      %v686 = vunpack.c.l.b16 %v678
      %v687 = vpack.c.b16 %v684, %v683
      %v688 = vpack.c.b16 %v686, %v685
      %691 = vmatpush.bf16.msra.mxu0 0
      %692 = vmatpush.bf16.msra.mxu0 0
      %693 = vmatpush.bf16.msra.mxu0 0
      %694 = vmatpush.bf16.msra.mxu0 0
      %695 = vmatpush.bf16.msra.mxu0 0
      %696 = vmatpush.bf16.msra.mxu0 0
      %697 = vmatpush.bf16.msra.mxu0 %v688
      %698 = vmatpush.bf16.msra.mxu0 %v687
      %699 = vmatmul.bf16.gmra.mxu0 %v660
      %v700 = vpop.f32.mrf.mxu0
      %v701 = vadd.f32 0.0, %v700
      %v702 = vpop.f32.mrf.mxu0
      %703 = vdwg.mxu0
      %vm704 = vcmask 0
      %705 = vst.msk [vmem:[%s472] sm:$0x1] %vm704, %v701
      %v707 = vsel %vm506, %v672, 0
      %v710 = vsel %vm506, %v480, 0
      %v713 = vsel %vm506, %v481, 0
      %715 = vmatpush.xpose.msra.mxu0 0.0
      %716 = vmatpush.xpose.msra.mxu0 0.0
      %717 = vmatpush.xpose.msra.mxu0 0.0
      %718 = vmatpush.xpose.msra.mxu0 0.0
      %719 = vmatpush.xpose.msra.mxu0 0.0
      %720 = vmatpush.xpose.msra.mxu0 0.0
      %721 = vmatpush.xpose.msra.mxu0 0.0
      %722 = vmatpush.xpose.msra.mxu0 0.0
      %723 = vmatpush.xpose.msra.mxu0 0.0
      %724 = vmatpush.xpose.msra.mxu0 0.0
      %725 = vmatpush.xpose.msra.mxu0 0.0
      %726 = vmatpush.xpose.msra.mxu0 0.0
      %727 = vmatpush.xpose.msra.mxu0 0.0
      %728 = vmatpush.xpose.msra.mxu0 0.0
      %729 = vmatpush.xpose.msra.mxu0 %v713
      %730 = vmatpush.xpose.msra.mxu0 %v710
      %731 = vmatmul.f32.gmra.mxu0 %v707
      %v732 = vpop.f32.mrf.mxu0
      %v733 = vadd.f32 0.0, %v732
      %734 = vdwg.mxu0
      %v735 = vld [vmem:[%s9] sm:$0xff]
      %v736 = vld [vmem:[%s9 + $0x8] sm:$0xff]
      %v738 = vsel %vm625, %v733, 0
      %740 = vmatpush.msra.mxu0 0.0
      %741 = vmatpush.msra.mxu0 0.0
      %742 = vmatpush.msra.mxu0 0.0
      %743 = vmatpush.msra.mxu0 0.0
      %744 = vmatpush.msra.mxu0 0.0
      %745 = vmatpush.msra.mxu0 0.0
      %746 = vmatpush.msra.mxu0 0.0
      %747 = vmatpush.msra.mxu0 0.0
      %748 = vmatpush.msra.mxu0 0.0
      %749 = vmatpush.msra.mxu0 0.0
      %750 = vmatpush.msra.mxu0 0.0
      %751 = vmatpush.msra.mxu0 0.0
      %752 = vmatpush.msra.mxu0 0.0
      %753 = vmatpush.msra.mxu0 0.0
      %754 = vmatpush.msra.mxu0 %v736
      %755 = vmatpush.msra.mxu0 %v735
      %756 = vmatmul.f32.gmra.mxu0 %v738
      %v757 = vpop.f32.mrf.mxu0
      %v758 = vadd.f32 0.0, %v757
      %759 = vdwg.mxu0
      %vm760 = vcmask 516096
      %761 = vst.msk [vmem:[%s465] sm:$0x1] %vm760, %v758
      %v762 = vld [vmem:[%s10] sm:$0xff]
      %v763 = vld [vmem:[%s10 + $0x8] sm:$0xff]
      %v764 = vld [vmem:[%s10 + $0x10] sm:$0xff]
      %v765 = vld [vmem:[%s10 + $0x18] sm:$0xff]
      %v766 = vld [vmem:[%s10 + $0x20] sm:$0xff]
      %v767 = vld [vmem:[%s10 + $0x28] sm:$0xff]
      %v768 = vld [vmem:[%s10 + $0x30] sm:$0xff]
      %v769 = vld [vmem:[%s10 + $0x38] sm:$0xff]
      %v770 = vld [vmem:[%s10 + $0x40] sm:$0xff]
      %v771 = vld [vmem:[%s10 + $0x48] sm:$0xff]
      %v772 = vld [vmem:[%s10 + $0x50] sm:$0xff]
      %v773 = vld [vmem:[%s10 + $0x58] sm:$0xff]
      %v774 = vld [vmem:[%s10 + $0x60] sm:$0xff]
      %v775 = vld [vmem:[%s10 + $0x68] sm:$0xff]
      %v776 = vld [vmem:[%s10 + $0x70] sm:$0xff]
      %v777 = vld [vmem:[%s10 + $0x78] sm:$0xff]
      %vm778 = vcmask 523264
      %v780 = vsel %vm778, %v758, 0
      %782 = vmatpush.msra.mxu0 0.0
      %783 = vmatpush.msra.mxu0 0.0
      %784 = vmatpush.msra.mxu0 0.0
      %785 = vmatpush.msra.mxu0 0.0
      %786 = vmatpush.msra.mxu0 0.0
      %787 = vmatpush.msra.mxu0 0.0
      %788 = vmatpush.msra.mxu0 0.0
      %789 = vmatpush.msra.mxu0 0.0
      %790 = vmatpush.msra.mxu0 %v776
      %791 = vmatpush.msra.mxu0 %v774
      %792 = vmatpush.msra.mxu0 %v772
      %793 = vmatpush.msra.mxu0 %v770
      %794 = vmatpush.msra.mxu0 %v768
      %795 = vmatpush.msra.mxu0 %v766
      %796 = vmatpush.msra.mxu0 %v764
      %797 = vmatpush.msra.mxu0 %v762
      %798 = vmatmul.f32.gmra.mxu0 %v780
      %v799 = vpop.f32.mrf.mxu0
      %v800 = vadd.f32 0.0, %v799
      %801 = vdwg.mxu0
      %802 = vmatpush.msra.mxu0 0.0
      %803 = vmatpush.msra.mxu0 0.0
      %804 = vmatpush.msra.mxu0 0.0
      %805 = vmatpush.msra.mxu0 0.0
      %806 = vmatpush.msra.mxu0 0.0
      %807 = vmatpush.msra.mxu0 0.0
      %808 = vmatpush.msra.mxu0 0.0
      %809 = vmatpush.msra.mxu0 0.0
      %810 = vmatpush.msra.mxu0 %v777
      %811 = vmatpush.msra.mxu0 %v775
      %812 = vmatpush.msra.mxu0 %v773
      %813 = vmatpush.msra.mxu0 %v771
      %814 = vmatpush.msra.mxu0 %v769
      %815 = vmatpush.msra.mxu0 %v767
      %816 = vmatpush.msra.mxu0 %v765
      %817 = vmatpush.msra.mxu0 %v763
      %818 = vmatmul.f32.gmra.mxu0 %v780
      %v819 = vpop.f32.mrf.mxu0
      %v820 = vadd.f32 0.0, %v819
      %821 = vdwg.mxu0
      %v824 = vrot.slane %v820, 7
      %vm825 = vcmask 1040384
      %v826 = vsel %vm825, %v800, %v824
      %v828 = vlaneseq
      %vm829 = vcmp.ge.s32.totalorder %v828, 0
      %vm830 = vcmp.lt.s32.totalorder %v828, 256
      %vm831 = vmand %vm829, %vm830
      %832 = vst.msk [vmem:[%s469] sm:$0x3] %vm831, %v826
      %p833 = scmp.lt.s32.totalorder %s25, 1
      %s834 = scalar_select %p833, %s25, 1
      %s835 = scalar_lea.vmem %s11, %s834
      %p836 = scmp.lt.s32.totalorder %s25, 1
      %s837 = scalar_select %p836, %s25, 1
      %s838 = smul.addr %s837, 2
      %s839 = scalar_lea.vmem %s12, %s838
      %p840 = scmp.lt.s32.totalorder %s25, 1
      %s841 = scalar_select %p840, %s25, 1
      %s842 = scalar_lea.vmem %s13, %s841
      // Predicated region
      $region65: #{_forward_impl.5} parent=63 // pred_check
        %p843 = pneg %p284
      $region66: #{_forward_impl.5} parent=63 // pred_check_branch
        %845 = sbr.rel (%p843) target = $region68
      $region67: #{_forward_impl.5} parent=63 // pred_region
        _
      $region68: #{_forward_impl.5} parent=63 // pred_fallthru
        _
      // Predicated region
      $region69: #{_forward_impl.5} parent=63 // pred_check
        %p846 = pneg %p310
      $region70: #{_forward_impl.5} parent=63 // pred_check_branch
        %848 = sbr.rel (%p846) target = $region72
      $region71: #{_forward_impl.5} parent=63 // pred_region
        _
      $region72: #{_forward_impl.5} parent=63 // pred_fallthru
        _
      // Predicated region
      $region73: #{_forward_impl.5} parent=63 // pred_check
        %p849 = pneg %p336
      $region74: #{_forward_impl.5} parent=63 // pred_check_branch
        %851 = sbr.rel (%p849) target = $region76
      $region75: #{_forward_impl.5} parent=63 // pred_region
        _
      $region76: #{_forward_impl.5} parent=63 // pred_fallthru
        _
    $region64: #{_forward_impl.5} parent=5 // pred_fallthru
      _
    %p852 = scmp.le.s32.totalorder 2, %s20
    // Predicated region
    $region77: #{_forward_impl.5} parent=5 // pred_check
      %p853 = pneg %p852
    $region78: #{_forward_impl.5} parent=5 // pred_check_branch
      %855 = sbr.rel (%p853) target = $region80
    $region79: #{_forward_impl.5} parent=5 // pred_region
      %s856 = ssub.s32 %s20, 2
      // Predicated region
      $region81: #{_forward_impl.5} parent=79 // pred_check
        %p857 = pneg %p290
      $region82: #{_forward_impl.5} parent=79 // pred_check_branch
        %859 = sbr.rel (%p857) target = $region84
      $region83: #{_forward_impl.5} parent=79 // pred_region
        %p860 = scmp.lt.s32.totalorder %s26, 1
        %s861 = scalar_select %p860, %s26, 1
        %s862 = scalar_lea.vmem %s11, %s861
      $region84: #{_forward_impl.5} parent=79 // pred_fallthru
        _
      // Predicated region
      $region85: #{_forward_impl.5} parent=79 // pred_check
        %p863 = pneg %p316
      $region86: #{_forward_impl.5} parent=79 // pred_check_branch
        %865 = sbr.rel (%p863) target = $region88
      $region87: #{_forward_impl.5} parent=79 // pred_region
        %p866 = scmp.lt.s32.totalorder %s26, 1
        %s867 = scalar_select %p866, %s26, 1
        %s868 = smul.addr %s867, 2
        %s869 = scalar_lea.vmem %s12, %s868
      $region88: #{_forward_impl.5} parent=79 // pred_fallthru
        _
      // Predicated region
      $region89: #{_forward_impl.5} parent=79 // pred_check
        %p870 = pneg %p342
      $region90: #{_forward_impl.5} parent=79 // pred_check_branch
        %872 = sbr.rel (%p870) target = $region92
      $region91: #{_forward_impl.5} parent=79 // pred_region
        %p873 = scmp.lt.s32.totalorder %s26, 1
        %s874 = scalar_select %p873, %s26, 1
        %s875 = scalar_lea.vmem %s13, %s874
      $region92: #{_forward_impl.5} parent=79 // pred_fallthru
        _
    $region80: #{_forward_impl.5} parent=5 // pred_fallthru
      _
  $region6: #{_forward_impl.5} parent=0 // loop_footer
    %s24 = sadd.s32 1, %s20
  $region7: #{_forward_impl.5} parent=0 // loop_footer_branch
    %19 = sbr.rel target = $region3
  $region8: #{_forward_impl.5} parent=0 // loop_exit
    _

</llo_original>
